<compile_context>
chip_gen: v7x
topology: tpu7x:2x2x1
jax: 0.10.0
libtpu: 0.0.40
codegen_flags: <defaults>
</compile_context>

<pallas_src>
import numpy as np
import jax
import jax.numpy as jnp
from jax.experimental import pallas as pl
from jax.experimental.pallas import tpu as pltpu

GN_GROUPS = 32
GN_EPS = 1e-5


def _interp_matrix(n_out, n_in):
    """1-D bilinear interpolation matrix with align_corners=True semantics."""
    m = np.zeros((n_out, n_in), np.float32)
    if n_out == 1:
        src = np.zeros((1,), np.float64)
    else:
        src = np.arange(n_out, dtype=np.float64) * (n_in - 1) / (n_out - 1)
    i0 = np.clip(np.floor(src).astype(np.int64), 0, n_in - 1)
    i1 = np.minimum(i0 + 1, n_in - 1)
    f = (src - i0).astype(np.float32)
    m[np.arange(n_out), i0] += 1.0 - f
    m[np.arange(n_out), i1] += f
    return jnp.asarray(m)


def _pick_chunk_h(H, W, Cin):
    """Largest divisor of H whose (chunk_h*W, 9*Cin) bf16 tap block <= ~4 MiB."""
    target = max(W, min(1024, (4 * 2 ** 20) // max(1, 18 * Cin)))
    best = 1
    for ch in range(1, H + 1):
        if H % ch == 0 and ch * W <= target:
            best = ch
    return best


def _make_conv_gn_relu_kernel(H, W, Cin, chunk_h):
    HW = H * W
    L = chunk_h * W
    n_chunks = H // chunk_h
    # Lane-aligned Cin -> one K=9*Cin matmul per chunk (concat of 128-aligned
    # tap slices).  Unaligned (small) Cin -> 9 accumulating dots on a
    # chunk-local value (still a single VMEM store per chunk).
    fused_k = (Cin % 128 == 0)

    def kernel(xpad_ref, w_ref, gmat_ref, gamma_ref, beta_ref, o_ref, conv_ref):
        # xpad_ref : (1, HW + 2W + 2, Cin) bf16  flattened image, W+1 zero rows
        #            of padding at both ends.
        # w_ref    : (9*Cin, Cout) bf16   conv weights, tap-major rows.
        # gmat_ref : (Cout, Cout) f32     GroupNorm group-average matrix.
        # gamma_ref, beta_ref : (1, Cout) f32.
        # o_ref    : (1, HW, Cout) bf16   output block.
        # conv_ref : (HW, Cout) f32 VMEM scratch (written once, read once).
        cout = gamma_ref.shape[-1]

        # Column-in-row index; identical for every chunk (chunks start at row
        # boundaries).  Masks kill the horizontal taps that wrap across rows.
        col = jax.lax.broadcasted_iota(jnp.int32, (L, 1), 0) % W
        not_left = col > 0
        not_right = col < (W - 1)

        s1 = jnp.zeros((1, cout), jnp.float32)
        s2 = jnp.zeros((1, cout), jnp.float32)

        # ---- pass 1: conv + GroupNorm partial sums, per row-chunk ----------
        for c in range(n_chunks):
            r0 = c * L
            taps = []
            for dy in range(3):
                for dx in range(3):
                    # tap (dy,dx) of output pixel r lives at padded row
                    # r + dy*W + dx; vertical OOB lands in the zero padding.
                    t = xpad_ref[0, pl.ds(r0 + dy * W + dx, L), :]
                    if dx == 0:
                        t = jnp.where(not_left, t, jnp.zeros_like(t))
                    elif dx == 2:
                        t = jnp.where(not_right, t, jnp.zeros_like(t))
                    taps.append(t)
            if fused_k:
                tap_blk = jnp.concatenate(taps, axis=-1)          # (L, 9*Cin)
                acc = jnp.dot(tap_blk, w_ref[...],
                              preferred_element_type=jnp.float32)  # (L, Cout)
            else:
                acc = jnp.zeros((L, cout), jnp.float32)
                for k, t in enumerate(taps):
                    acc = acc + jnp.dot(t, w_ref[pl.ds(k * Cin, Cin), :],
                                        preferred_element_type=jnp.float32)
            s1 = s1 + jnp.sum(acc, axis=0, keepdims=True)
            s2 = s2 + jnp.sum(acc * acc, axis=0, keepdims=True)
            conv_ref[pl.ds(r0, L), :] = acc                        # single store

        # ---- GroupNorm stats + folded affine -------------------------------
        mean = jnp.dot(s1, gmat_ref[...], preferred_element_type=jnp.float32)
        ex2 = jnp.dot(s2, gmat_ref[...], preferred_element_type=jnp.float32)
        var = jnp.maximum(ex2 - mean * mean, 0.0)                  # clamp
        inv = jax.lax.rsqrt(var + GN_EPS)
        scale = gamma_ref[...] * inv
        shift = beta_ref[...] - mean * scale

        # ---- pass 2: normalize + ReLU in one multiply-add sweep, bf16 out --
        for c in range(n_chunks):
            r0 = c * L
            y = jnp.maximum(conv_ref[pl.ds(r0, L), :] * scale + shift, 0.0)
            o_ref[0, pl.ds(r0, L), :] = y.astype(o_ref.dtype)

    return kernel


def conv3x3_gn_relu_block(x_nhwc, w_hwio, gamma, beta, out_hw, upsample):
    """One Conv3x3GNReLU block (+ optional bilinear resize to out_hw)."""
    N, H, W, Cin = x_nhwc.shape
    Cout = w_hwio.shape[-1]
    assert Cout % GN_GROUPS == 0
    gs = Cout // GN_GROUPS
    HW = H * W
    P = HW + 2 * W + 2
    chunk_h = _pick_chunk_h(H, W, Cin)
    L = chunk_h * W

    # glue: flatten spatial row-major, pad with W+1 zero rows both ends, bf16.
    xflat = x_nhwc.reshape(N, HW, Cin).astype(jnp.bfloat16)
    zpad = jnp.zeros((N, W + 1, Cin), jnp.bfloat16)
    xpad = jnp.concatenate([zpad, xflat, zpad], axis=1)          # (N, P, Cin)

    wflat = w_hwio.reshape(9 * Cin, Cout).astype(jnp.bfloat16)   # tap-major
    gid = np.arange(Cout) // gs
    gmat = jnp.asarray((gid[:, None] == gid[None, :]).astype(np.float32)
                       / float(HW * gs))
    gamma2 = gamma.reshape(1, Cout).astype(jnp.float32)
    beta2 = beta.reshape(1, Cout).astype(jnp.float32)

    # Raise the scoped VMEM limit only when the whole-image blocks need it.
    est = (2 * P * Cin * 2 + 2 * HW * Cout * 2 + HW * Cout * 4
           + L * 9 * Cin * 2 + L * Cout * 4
           + 9 * Cin * Cout * 2 + Cout * Cout * 4)
    cp_kwargs = dict(dimension_semantics=("parallel",))
    if est > 12 * 2 ** 20:
        cp_kwargs["vmem_limit_bytes"] = int(min(2 * est, 64 * 2 ** 20))

    y = pl.pallas_call(
        _make_conv_gn_relu_kernel(H, W, Cin, chunk_h),
        out_shape=jax.ShapeDtypeStruct((N, HW, Cout), jnp.bfloat16),
        grid_spec=pltpu.PrefetchScalarGridSpec(
            num_scalar_prefetch=0,
            grid=(N,),
            in_specs=[
                pl.BlockSpec((1, P, Cin), lambda b: (b, 0, 0)),
                pl.BlockSpec((9 * Cin, Cout), lambda b: (0, 0)),
                pl.BlockSpec((Cout, Cout), lambda b: (0, 0)),
                pl.BlockSpec((1, Cout), lambda b: (0, 0)),
                pl.BlockSpec((1, Cout), lambda b: (0, 0)),
            ],
            out_specs=pl.BlockSpec((1, HW, Cout), lambda b: (b, 0, 0)),
            scratch_shapes=[pltpu.VMEM((HW, Cout), jnp.float32)],
        ),
        compiler_params=pltpu.CompilerParams(**cp_kwargs),
    )(xpad, wflat, gmat, gamma2, beta2)                          # (N, HW, C) bf16

    y = y.reshape(N, H, W, Cout)
    if not upsample:
        return y

    # Separable bilinear resize (align_corners=True) as XLA glue:
    # bf16 operands, f32 accumulation.  H axis then W axis (matches reference).
    Ho, Wo = out_hw
    ah = _interp_matrix(Ho, H).astype(jnp.bfloat16)
    aw = _interp_matrix(Wo, W).astype(jnp.bfloat16)
    t = jnp.einsum('oh,nhwc->nowc', ah, y,
                   preferred_element_type=jnp.float32).astype(jnp.bfloat16)
    out = jnp.einsum('pw,nowc->nopc', aw, t,
                     preferred_element_type=jnp.float32).astype(jnp.bfloat16)
    return out


# ---------------------- SegmentationBlock (parameters + forward) -----------

def init_segmentation_block(key, in_channels, out_channels, n_upsamples):
    n_blocks = max(n_upsamples, 1)
    params = []
    for i in range(n_blocks):
        cin = in_channels if i == 0 else out_channels
        key, kw, kg, kb = jax.random.split(key, 4)
        w = jax.random.normal(kw, (3, 3, cin, out_channels), jnp.float32) \
            * np.sqrt(2.0 / (9 * cin))
        gamma = 1.0 + 0.1 * jax.random.normal(kg, (out_channels,), jnp.float32)
        beta = 0.1 * jax.random.normal(kb, (out_channels,), jnp.float32)
        params.append((w, gamma, beta))
    return params


def segmentation_block_forward(params, x_nhwc, sizes, n_upsamples):
    upsample_flags = [bool(n_upsamples)] + [True] * (len(params) - 1)
    for i, ((w, gamma, beta), up) in enumerate(zip(params, upsample_flags)):
        H, W = x_nhwc.shape[1], x_nhwc.shape[2]
        out_hw = tuple(sizes[i]) if up else (H, W)
        x_nhwc = conv3x3_gn_relu_block(x_nhwc, w, gamma, beta, out_hw, up)
    return x_nhwc.astype(jnp.float32)


# ---------------------- pure-JAX reference (for verification) --------------

def _ref_block(x, w, gamma, beta, out_hw, upsample):
    N, H, W, Cin = x.shape
    Cout = w.shape[-1]
    y = jax.lax.conv_general_dilated(
        x, w, window_strides=(1, 1), padding='SAME',
        dimension_numbers=('NHWC', 'HWIO', 'NHWC'))
    gs = Cout // GN_GROUPS
    yg = y.reshape(N, H, W, GN_GROUPS, gs)
    mean = yg.mean(axis=(1, 2, 4), keepdims=True)
    var = ((yg - mean) ** 2).mean(axis=(1, 2, 4), keepdims=True)
    yn = ((yg - mean) / jnp.sqrt(var + GN_EPS)).reshape(N, H, W, Cout)
    yn = jnp.maximum(yn * gamma.reshape(1, 1, 1, Cout)
                     + beta.reshape(1, 1, 1, Cout), 0.0)
    if not upsample:
        return yn
    Ah = _interp_matrix(out_hw[0], H)
    Aw = _interp_matrix(out_hw[1], W)
    t = jnp.einsum('oh,nhwc->nowc', Ah, yn)
    return jnp.einsum('pw,nowc->nopc', Aw, t)


def _ref_forward(params, x_nhwc, sizes, n_upsamples):
    upsample_flags = [bool(n_upsamples)] + [True] * (len(params) - 1)
    for i, ((w, gamma, beta), up) in enumerate(zip(params, upsample_flags)):
        H, W = x_nhwc.shape[1], x_nhwc.shape[2]
        out_hw = tuple(sizes[i]) if up else (H, W)
        x_nhwc = _ref_block(x_nhwc, w, gamma, beta, out_hw, up)
    return x_nhwc


if __name__ == "__main__":
    key = jax.random.PRNGKey(0)
    N, Cin, H, W = 2, 4, 8, 8
    Cout = 128                     # FPN decoder width; GroupNorm needs C % 32 == 0
    n_upsamples = 2
    sizes = [(16, 16), (32, 32)]   # one size per block, as in the PyTorch forward

    kx, kp = jax.random.split(key)
    x_nchw = jax.random.normal(kx, (N, Cin, H, W), jnp.float32)  # PyTorch layout
    x_nhwc = jnp.transpose(x_nchw, (0, 2, 3, 1))                 # kernel layout

    params = init_segmentation_block(kp, Cin, Cout, n_upsamples)

    out_nhwc = segmentation_block_forward(params, x_nhwc, sizes, n_upsamples)
    out_nchw = jnp.transpose(out_nhwc, (0, 3, 1, 2))
    jax.block_until_ready(out_nchw)
    assert out_nchw.shape == (N, Cout, sizes[-1][0], sizes[-1][1])

    ref_nhwc = _ref_forward(params, x_nhwc, sizes, n_upsamples)
    err = float(jnp.max(jnp.abs(out_nhwc - ref_nhwc)))
    scale = float(jnp.max(jnp.abs(ref_nhwc))) + 1e-6
    # bf16 conv / bf16 kernel output / bf16 resize operands across two chained
    # blocks vs the pure-f32 reference -> allow ~3% max relative deviation.
    assert err / scale < 3e-2, f"mismatch vs reference: rel err {err / scale}"

    print("KERNEL_OK")
</pallas_src>

<mosaic_0001>
module attributes {stable_mosaic.version = 11 : i64} {
  func.func @kernel(%arg0: i32, %arg1: memref<1x82x4xbf16, #tpu.memory_space<vmem>>, %arg2: memref<36x128xbf16, #tpu.memory_space<vmem>>, %arg3: memref<128x128xf32, #tpu.memory_space<vmem>>, %arg4: memref<1x128xf32, #tpu.memory_space<vmem>>, %arg5: memref<1x128xf32, #tpu.memory_space<vmem>>, %arg6: memref<1x64x128xbf16, #tpu.memory_space<vmem>>, %arg7: memref<64x128xf32, #tpu.memory_space<vmem>>) attributes {dimension_semantics = [#tpu.dimension_semantics<parallel>], iteration_bounds = array<i64: 2>, scalar_prefetch = 0 : i64, scratch_operands = 1 : i64, tpu.core_type = #tpu.core_type<tc>, window_params = [{transform_indices = @transform_0, window_bounds = array<i64: 1, 82, 4>}, {pipeline_mode = #tpu.pipeline_mode<synchronous>, transform_indices = @transform_1, window_bounds = array<i64: 36, 128>}, {pipeline_mode = #tpu.pipeline_mode<synchronous>, transform_indices = @transform_2, window_bounds = array<i64: 128, 128>}, {pipeline_mode = #tpu.pipeline_mode<synchronous>, transform_indices = @transform_3, window_bounds = array<i64: 1, 128>}, {pipeline_mode = #tpu.pipeline_mode<synchronous>, transform_indices = @transform_4, window_bounds = array<i64: 1, 128>}, {transform_indices = @transform_5, window_bounds = array<i64: 1, 64, 128>}]} {
    %0 = tpu.iota {dimensions = array<i32: 0>} : vector<64x1xi32>
    %c8_i32 = arith.constant 8 : i32
    %c0_i32 = arith.constant 0 : i32
    %1 = arith.cmpi eq, %c8_i32, %c0_i32 : i32
    %c1_i32 = arith.constant 1 : i32
    %2 = arith.select %1, %c1_i32, %c8_i32 : i32
    %3 = vector.broadcast %2 : i32 to vector<64x1xi32>
    %4 = arith.remsi %0, %3 : vector<64x1xi32>
    %c0_i32_0 = arith.constant 0 : i32
    %5 = vector.broadcast %c0_i32_0 : i32 to vector<64x1xi32>
    %6 = arith.cmpi ne, %4, %5 : vector<64x1xi32>
    %c0_i32_1 = arith.constant 0 : i32
    %7 = vector.broadcast %c0_i32_1 : i32 to vector<64x1xi32>
    %8 = arith.cmpi slt, %4, %7 : vector<64x1xi32>
    %c0_i32_2 = arith.constant 0 : i32
    %9 = arith.cmpi slt, %2, %c0_i32_2 : i32
    %10 = vector.broadcast %9 : i1 to vector<64x1xi1>
    %11 = vector.broadcast %10 : vector<64x1xi1> to vector<64x1xi1>
    %12 = arith.xori %8, %11 : vector<64x1xi1>
    %13 = arith.andi %12, %6 : vector<64x1xi1>
    %14 = vector.broadcast %2 : i32 to vector<64x1xi32>
    %15 = arith.addi %4, %14 : vector<64x1xi32>
    %16 = arith.select %13, %15, %4 : vector<64x1xi1>, vector<64x1xi32>
    %c0_i32_3 = arith.constant 0 : i32
    %17 = vector.broadcast %c0_i32_3 : i32 to vector<64x1xi32>
    %18 = arith.cmpi sgt, %16, %17 : vector<64x1xi32>
    %c7_i32 = arith.constant 7 : i32
    %19 = vector.broadcast %c7_i32 : i32 to vector<64x1xi32>
    %20 = arith.cmpi slt, %16, %19 : vector<64x1xi32>
    %cst = arith.constant 0.000000e+00 : f32
    %21 = vector.broadcast %cst : f32 to vector<1x128xf32>
    %cst_4 = arith.constant 0.000000e+00 : f32
    %22 = vector.broadcast %cst_4 : f32 to vector<1x128xf32>
    %c0 = arith.constant 0 : index
    %c0_5 = arith.constant 0 : index
    %c0_6 = arith.constant 0 : index
    %23 = vector.load %arg1[%c0, %c0_5, %c0_6] : memref<1x82x4xbf16, #tpu.memory_space<vmem>>, vector<1x64x4xbf16>
    %24 = vector.shape_cast %23 : vector<1x64x4xbf16> to vector<64x4xbf16>
    %cst_7 = arith.constant 0.000000e+00 : bf16
    %25 = vector.broadcast %cst_7 : bf16 to vector<64x4xbf16>
    %26 = vector.shape_cast %18 : vector<64x1xi1> to vector<64x1xi1>
    %27 = vector.broadcast %26 : vector<64x1xi1> to vector<64x4xi1>
    %28 = arith.select %27, %24, %25 : vector<64x4xi1>, vector<64x4xbf16>
    %c0_8 = arith.constant 0 : index
    %c1 = arith.constant 1 : index
    %c0_9 = arith.constant 0 : index
    %29 = vector.load %arg1[%c0_8, %c1, %c0_9] : memref<1x82x4xbf16, #tpu.memory_space<vmem>>, vector<1x64x4xbf16>
    %30 = vector.shape_cast %29 : vector<1x64x4xbf16> to vector<64x4xbf16>
    %c0_10 = arith.constant 0 : index
    %c2 = arith.constant 2 : index
    %c0_11 = arith.constant 0 : index
    %31 = vector.load %arg1[%c0_10, %c2, %c0_11] : memref<1x82x4xbf16, #tpu.memory_space<vmem>>, vector<1x64x4xbf16>
    %32 = vector.shape_cast %31 : vector<1x64x4xbf16> to vector<64x4xbf16>
    %cst_12 = arith.constant 0.000000e+00 : bf16
    %33 = vector.broadcast %cst_12 : bf16 to vector<64x4xbf16>
    %34 = vector.shape_cast %20 : vector<64x1xi1> to vector<64x1xi1>
    %35 = vector.broadcast %34 : vector<64x1xi1> to vector<64x4xi1>
    %36 = arith.select %35, %32, %33 : vector<64x4xi1>, vector<64x4xbf16>
    %c0_13 = arith.constant 0 : index
    %c8 = arith.constant 8 : index
    %c0_14 = arith.constant 0 : index
    %37 = vector.load %arg1[%c0_13, %c8, %c0_14] : memref<1x82x4xbf16, #tpu.memory_space<vmem>>, vector<1x64x4xbf16>
    %38 = vector.shape_cast %37 : vector<1x64x4xbf16> to vector<64x4xbf16>
    %cst_15 = arith.constant 0.000000e+00 : bf16
    %39 = vector.broadcast %cst_15 : bf16 to vector<64x4xbf16>
    %40 = vector.shape_cast %18 : vector<64x1xi1> to vector<64x1xi1>
    %41 = vector.broadcast %40 : vector<64x1xi1> to vector<64x4xi1>
    %42 = arith.select %41, %38, %39 : vector<64x4xi1>, vector<64x4xbf16>
    %c0_16 = arith.constant 0 : index
    %c9 = arith.constant 9 : index
    %c0_17 = arith.constant 0 : index
    %43 = vector.load %arg1[%c0_16, %c9, %c0_17] : memref<1x82x4xbf16, #tpu.memory_space<vmem>>, vector<1x64x4xbf16>
    %44 = vector.shape_cast %43 : vector<1x64x4xbf16> to vector<64x4xbf16>
    %c0_18 = arith.constant 0 : index
    %c10 = arith.constant 10 : index
    %c0_19 = arith.constant 0 : index
    %45 = vector.load %arg1[%c0_18, %c10, %c0_19] : memref<1x82x4xbf16, #tpu.memory_space<vmem>>, vector<1x64x4xbf16>
    %46 = vector.shape_cast %45 : vector<1x64x4xbf16> to vector<64x4xbf16>
    %cst_20 = arith.constant 0.000000e+00 : bf16
    %47 = vector.broadcast %cst_20 : bf16 to vector<64x4xbf16>
    %48 = vector.shape_cast %20 : vector<64x1xi1> to vector<64x1xi1>
    %49 = vector.broadcast %48 : vector<64x1xi1> to vector<64x4xi1>
    %50 = arith.select %49, %46, %47 : vector<64x4xi1>, vector<64x4xbf16>
    %c0_21 = arith.constant 0 : index
    %c16 = arith.constant 16 : index
    %c0_22 = arith.constant 0 : index
    %51 = vector.load %arg1[%c0_21, %c16, %c0_22] : memref<1x82x4xbf16, #tpu.memory_space<vmem>>, vector<1x64x4xbf16>
    %52 = vector.shape_cast %51 : vector<1x64x4xbf16> to vector<64x4xbf16>
    %cst_23 = arith.constant 0.000000e+00 : bf16
    %53 = vector.broadcast %cst_23 : bf16 to vector<64x4xbf16>
    %54 = vector.shape_cast %18 : vector<64x1xi1> to vector<64x1xi1>
    %55 = vector.broadcast %54 : vector<64x1xi1> to vector<64x4xi1>
    %56 = arith.select %55, %52, %53 : vector<64x4xi1>, vector<64x4xbf16>
    %c0_24 = arith.constant 0 : index
    %c17 = arith.constant 17 : index
    %c0_25 = arith.constant 0 : index
    %57 = vector.load %arg1[%c0_24, %c17, %c0_25] : memref<1x82x4xbf16, #tpu.memory_space<vmem>>, vector<1x64x4xbf16>
    %58 = vector.shape_cast %57 : vector<1x64x4xbf16> to vector<64x4xbf16>
    %c0_26 = arith.constant 0 : index
    %c18 = arith.constant 18 : index
    %c0_27 = arith.constant 0 : index
    %59 = vector.load %arg1[%c0_26, %c18, %c0_27] : memref<1x82x4xbf16, #tpu.memory_space<vmem>>, vector<1x64x4xbf16>
    %60 = vector.shape_cast %59 : vector<1x64x4xbf16> to vector<64x4xbf16>
    %cst_28 = arith.constant 0.000000e+00 : bf16
    %61 = vector.broadcast %cst_28 : bf16 to vector<64x4xbf16>
    %62 = vector.shape_cast %20 : vector<64x1xi1> to vector<64x1xi1>
    %63 = vector.broadcast %62 : vector<64x1xi1> to vector<64x4xi1>
    %64 = arith.select %63, %60, %61 : vector<64x4xi1>, vector<64x4xbf16>
    %cst_29 = arith.constant 0.000000e+00 : f32
    %65 = vector.broadcast %cst_29 : f32 to vector<64x128xf32>
    %c0_30 = arith.constant 0 : index
    %c0_31 = arith.constant 0 : index
    %66 = vector.load %arg2[%c0_30, %c0_31] : memref<36x128xbf16, #tpu.memory_space<vmem>>, vector<4x128xbf16>
    %cst_32 = arith.constant dense<0.000000e+00> : vector<64x128xf32>
    %67 = tpu.matmul %28, %66, %cst_32 {dimension_numbers = #tpu.dot_dimension_numbers<[1], [0], [0], [1], [0, 0, 1, 1], [], []>} : vector<64x4xbf16>, vector<4x128xbf16>, vector<64x128xf32> -> vector<64x128xf32>
    %68 = arith.addf %65, %67 : vector<64x128xf32>
    %c4 = arith.constant 4 : index
    %c0_33 = arith.constant 0 : index
    %69 = vector.load %arg2[%c4, %c0_33] : memref<36x128xbf16, #tpu.memory_space<vmem>>, vector<4x128xbf16>
    %cst_34 = arith.constant dense<0.000000e+00> : vector<64x128xf32>
    %70 = tpu.matmul %30, %69, %cst_34 {dimension_numbers = #tpu.dot_dimension_numbers<[1], [0], [0], [1], [0, 0, 1, 1], [], []>} : vector<64x4xbf16>, vector<4x128xbf16>, vector<64x128xf32> -> vector<64x128xf32>
    %71 = arith.addf %68, %70 : vector<64x128xf32>
    %c8_35 = arith.constant 8 : index
    %c0_36 = arith.constant 0 : index
    %72 = vector.load %arg2[%c8_35, %c0_36] : memref<36x128xbf16, #tpu.memory_space<vmem>>, vector<4x128xbf16>
    %cst_37 = arith.constant dense<0.000000e+00> : vector<64x128xf32>
    %73 = tpu.matmul %36, %72, %cst_37 {dimension_numbers = #tpu.dot_dimension_numbers<[1], [0], [0], [1], [0, 0, 1, 1], [], []>} : vector<64x4xbf16>, vector<4x128xbf16>, vector<64x128xf32> -> vector<64x128xf32>
    %74 = arith.addf %71, %73 : vector<64x128xf32>
    %c12 = arith.constant 12 : index
    %c0_38 = arith.constant 0 : index
    %75 = vector.load %arg2[%c12, %c0_38] : memref<36x128xbf16, #tpu.memory_space<vmem>>, vector<4x128xbf16>
    %cst_39 = arith.constant dense<0.000000e+00> : vector<64x128xf32>
    %76 = tpu.matmul %42, %75, %cst_39 {dimension_numbers = #tpu.dot_dimension_numbers<[1], [0], [0], [1], [0, 0, 1, 1], [], []>} : vector<64x4xbf16>, vector<4x128xbf16>, vector<64x128xf32> -> vector<64x128xf32>
    %77 = arith.addf %74, %76 : vector<64x128xf32>
    %c16_40 = arith.constant 16 : index
    %c0_41 = arith.constant 0 : index
    %78 = vector.load %arg2[%c16_40, %c0_41] : memref<36x128xbf16, #tpu.memory_space<vmem>>, vector<4x128xbf16>
    %cst_42 = arith.constant dense<0.000000e+00> : vector<64x128xf32>
    %79 = tpu.matmul %44, %78, %cst_42 {dimension_numbers = #tpu.dot_dimension_numbers<[1], [0], [0], [1], [0, 0, 1, 1], [], []>} : vector<64x4xbf16>, vector<4x128xbf16>, vector<64x128xf32> -> vector<64x128xf32>
    %80 = arith.addf %77, %79 : vector<64x128xf32>
    %c20 = arith.constant 20 : index
    %c0_43 = arith.constant 0 : index
    %81 = vector.load %arg2[%c20, %c0_43] : memref<36x128xbf16, #tpu.memory_space<vmem>>, vector<4x128xbf16>
    %cst_44 = arith.constant dense<0.000000e+00> : vector<64x128xf32>
    %82 = tpu.matmul %50, %81, %cst_44 {dimension_numbers = #tpu.dot_dimension_numbers<[1], [0], [0], [1], [0, 0, 1, 1], [], []>} : vector<64x4xbf16>, vector<4x128xbf16>, vector<64x128xf32> -> vector<64x128xf32>
    %83 = arith.addf %80, %82 : vector<64x128xf32>
    %c24 = arith.constant 24 : index
    %c0_45 = arith.constant 0 : index
    %84 = vector.load %arg2[%c24, %c0_45] : memref<36x128xbf16, #tpu.memory_space<vmem>>, vector<4x128xbf16>
    %cst_46 = arith.constant dense<0.000000e+00> : vector<64x128xf32>
    %85 = tpu.matmul %56, %84, %cst_46 {dimension_numbers = #tpu.dot_dimension_numbers<[1], [0], [0], [1], [0, 0, 1, 1], [], []>} : vector<64x4xbf16>, vector<4x128xbf16>, vector<64x128xf32> -> vector<64x128xf32>
    %86 = arith.addf %83, %85 : vector<64x128xf32>
    %c28 = arith.constant 28 : index
    %c0_47 = arith.constant 0 : index
    %87 = vector.load %arg2[%c28, %c0_47] : memref<36x128xbf16, #tpu.memory_space<vmem>>, vector<4x128xbf16>
    %cst_48 = arith.constant dense<0.000000e+00> : vector<64x128xf32>
    %88 = tpu.matmul %58, %87, %cst_48 {dimension_numbers = #tpu.dot_dimension_numbers<[1], [0], [0], [1], [0, 0, 1, 1], [], []>} : vector<64x4xbf16>, vector<4x128xbf16>, vector<64x128xf32> -> vector<64x128xf32>
    %89 = arith.addf %86, %88 : vector<64x128xf32>
    %c32 = arith.constant 32 : index
    %c0_49 = arith.constant 0 : index
    %90 = vector.load %arg2[%c32, %c0_49] : memref<36x128xbf16, #tpu.memory_space<vmem>>, vector<4x128xbf16>
    %cst_50 = arith.constant dense<0.000000e+00> : vector<64x128xf32>
    %91 = tpu.matmul %64, %90, %cst_50 {dimension_numbers = #tpu.dot_dimension_numbers<[1], [0], [0], [1], [0, 0, 1, 1], [], []>} : vector<64x4xbf16>, vector<4x128xbf16>, vector<64x128xf32> -> vector<64x128xf32>
    %92 = arith.addf %89, %91 : vector<64x128xf32>
    %cst_51 = arith.constant dense<0.000000e+00> : vector<128xf32>
    %93 = vector.multi_reduction <add>, %92, %cst_51 [0] : vector<64x128xf32> to vector<128xf32>
    %94 = vector.shape_cast %93 : vector<128xf32> to vector<1x128xf32>
    %95 = arith.addf %21, %94 : vector<1x128xf32>
    %96 = arith.mulf %92, %92 : vector<64x128xf32>
    %cst_52 = arith.constant dense<0.000000e+00> : vector<128xf32>
    %97 = vector.multi_reduction <add>, %96, %cst_52 [0] : vector<64x128xf32> to vector<128xf32>
    %98 = vector.shape_cast %97 : vector<128xf32> to vector<1x128xf32>
    %99 = arith.addf %22, %98 : vector<1x128xf32>
    %c0_53 = arith.constant 0 : index
    %c0_54 = arith.constant 0 : index
    %100 = vector.load %arg7[%c0_53, %c0_54] : memref<64x128xf32, #tpu.memory_space<vmem>>, vector<64x128xf32>
    tpu.vector_store %arg7[%c0_53, %c0_54], %92 {strides = array<i32>} : memref<64x128xf32, #tpu.memory_space<vmem>>, vector<64x128xf32>,
    %c0_55 = arith.constant 0 : index
    %c0_56 = arith.constant 0 : index
    %101 = vector.load %arg3[%c0_55, %c0_56] : memref<128x128xf32, #tpu.memory_space<vmem>>, vector<128x128xf32>
    %cst_57 = arith.constant dense<0.000000e+00> : vector<1x128xf32>
    %102 = tpu.matmul %95, %101, %cst_57 {dimension_numbers = #tpu.dot_dimension_numbers<[1], [0], [0], [1], [0, 0, 1, 1], [], []>} : vector<1x128xf32>, vector<128x128xf32>, vector<1x128xf32> -> vector<1x128xf32>
    %c0_58 = arith.constant 0 : index
    %c0_59 = arith.constant 0 : index
    %103 = vector.load %arg3[%c0_58, %c0_59] : memref<128x128xf32, #tpu.memory_space<vmem>>, vector<128x128xf32>
    %cst_60 = arith.constant dense<0.000000e+00> : vector<1x128xf32>
    %104 = tpu.matmul %99, %103, %cst_60 {dimension_numbers = #tpu.dot_dimension_numbers<[1], [0], [0], [1], [0, 0, 1, 1], [], []>} : vector<1x128xf32>, vector<128x128xf32>, vector<1x128xf32> -> vector<1x128xf32>
    %105 = arith.mulf %102, %102 : vector<1x128xf32>
    %106 = arith.subf %104, %105 : vector<1x128xf32>
    %cst_61 = arith.constant 0.000000e+00 : f32
    %107 = vector.broadcast %cst_61 : f32 to vector<1x128xf32>
    %108 = arith.maximumf %106, %107 : vector<1x128xf32>
    %cst_62 = arith.constant 9.99999974E-6 : f32
    %109 = vector.broadcast %cst_62 : f32 to vector<1x128xf32>
    %110 = arith.addf %108, %109 : vector<1x128xf32>
    %111 = math.rsqrt %110 : vector<1x128xf32>
    %c0_63 = arith.constant 0 : index
    %c0_64 = arith.constant 0 : index
    %112 = vector.load %arg4[%c0_63, %c0_64] : memref<1x128xf32, #tpu.memory_space<vmem>>, vector<1x128xf32>
    %113 = arith.mulf %112, %111 : vector<1x128xf32>
    %c0_65 = arith.constant 0 : index
    %c0_66 = arith.constant 0 : index
    %114 = vector.load %arg5[%c0_65, %c0_66] : memref<1x128xf32, #tpu.memory_space<vmem>>, vector<1x128xf32>
    %115 = arith.mulf %102, %113 : vector<1x128xf32>
    %116 = arith.subf %114, %115 : vector<1x128xf32>
    %c0_67 = arith.constant 0 : index
    %c0_68 = arith.constant 0 : index
    %117 = vector.load %arg7[%c0_67, %c0_68] : memref<64x128xf32, #tpu.memory_space<vmem>>, vector<64x128xf32>
    %118 = vector.broadcast %113 : vector<1x128xf32> to vector<64x128xf32>
    %119 = arith.mulf %117, %118 : vector<64x128xf32>
    %120 = vector.broadcast %116 : vector<1x128xf32> to vector<64x128xf32>
    %121 = arith.addf %119, %120 : vector<64x128xf32>
    %cst_69 = arith.constant 0.000000e+00 : f32
    %122 = vector.broadcast %cst_69 : f32 to vector<64x128xf32>
    %123 = arith.maximumf %121, %122 : vector<64x128xf32>
    %124 = arith.truncf %123 : vector<64x128xf32> to vector<64x128xbf16>
    %c0_70 = arith.constant 0 : index
    %c0_71 = arith.constant 0 : index
    %c0_72 = arith.constant 0 : index
    %125 = vector.load %arg6[%c0_70, %c0_71, %c0_72] : memref<1x64x128xbf16, #tpu.memory_space<vmem>>, vector<1x64x128xbf16>
    %126 = vector.shape_cast %125 : vector<1x64x128xbf16> to vector<64x128xbf16>
    %127 = vector.shape_cast %124 : vector<64x128xbf16> to vector<1x64x128xbf16>
    tpu.vector_store %arg6[%c0_70, %c0_71, %c0_72], %127 {strides = array<i32>} : memref<1x64x128xbf16, #tpu.memory_space<vmem>>, vector<1x64x128xbf16>,
    return
  }
  func.func @transform_0(%arg0: i32) -> (i32, i32, i32) {
    %c0_i32 = arith.constant 0 : i32
    %c0_i32_0 = arith.constant 0 : i32
    %c0_i32_1 = arith.constant 0 : i32
    return %arg0, %c0_i32, %c0_i32_0 : i32, i32, i32
  }
  func.func @transform_1(%arg0: i32) -> (i32, i32) {
    %c0_i32 = arith.constant 0 : i32
    %c0_i32_0 = arith.constant 0 : i32
    %c0_i32_1 = arith.constant 0 : i32
    return %c0_i32, %c0_i32_0 : i32, i32
  }
  func.func @transform_2(%arg0: i32) -> (i32, i32) {
    %c0_i32 = arith.constant 0 : i32
    %c0_i32_0 = arith.constant 0 : i32
    %c0_i32_1 = arith.constant 0 : i32
    return %c0_i32, %c0_i32_0 : i32, i32
  }
  func.func @transform_3(%arg0: i32) -> (i32, i32) {
    %c0_i32 = arith.constant 0 : i32
    %c0_i32_0 = arith.constant 0 : i32
    %c0_i32_1 = arith.constant 0 : i32
    return %c0_i32, %c0_i32_0 : i32, i32
  }
  func.func @transform_4(%arg0: i32) -> (i32, i32) {
    %c0_i32 = arith.constant 0 : i32
    %c0_i32_0 = arith.constant 0 : i32
    %c0_i32_1 = arith.constant 0 : i32
    return %c0_i32, %c0_i32_0 : i32, i32
  }
  func.func @transform_5(%arg0: i32) -> (i32, i32, i32) {
    %c0_i32 = arith.constant 0 : i32
    %c0_i32_0 = arith.constant 0 : i32
    %c0_i32_1 = arith.constant 0 : i32
    return %arg0, %c0_i32, %c0_i32_0 : i32, i32, i32
  }
}

</mosaic_0001>

<llo_original>
// kernel: tpu_custom_call.1
$region0: #{tpu_custom_call.1}
  #allocation0 [shape = 'u32[]', space=smem, size = 0x4, offset = 0x4, fixed_abs, tag = 'smem constant byte address 0x4 - core index']
  #allocation1 [shape = 'u32[144,128]{1,0:T(1,128)}', space=vmem, size = 0x12000, scoped, tag = 'internal scratch']
  #allocation2 [shape = 'f32[64,128]{1,0:T(8,128)}', space=vmem, size = 0x8000, scoped, tag = 'scratch operand']
  %s0 = inlined_call_operand.vmem [shape: bf16[2,82,4], index: 0, kind: input, shape index: {}]
  %s1 = inlined_call_operand.vmem [shape: bf16[36,128], index: 1, kind: input, shape index: {}]
  %s2 = inlined_call_operand.hbm [shape: f32[128,128], index: 2, kind: input, shape index: {}]
  %s3 = inlined_call_operand.vmem [shape: f32[1,128], index: 3, kind: input, shape index: {}]
  %s4 = inlined_call_operand.vmem [shape: f32[1,128], index: 4, kind: input, shape index: {}]
  %s5 = inlined_call_operand.hbm [shape: bf16[2,64,128], index: 5, kind: output, shape index: {}]
  %s6 = sld [smem:[#allocation0]]
  $region57: #{tpu_custom_call.1} parent=0
    _
  %s8 = ssub.s32 1, %s6
  %s9 = scalar_select 0, %s8, %s6
  $region1: #{tpu_custom_call.1} parent=0
    #allocation3 [shape = 'u8[65536]{0}', space=vmem, size = 0x10000, scoped, tag = 'input window, operand 2, single buffered']
    #allocation4 [shape = 's32[2]{0}', space=sflag, size = 0x8, scoped, tag = 'scoped memory for tpu_custom_call.1']
    #allocation5 [shape = 's32[2]{0}', space=sflag, size = 0x8, scoped, tag = 'scoped memory for tpu_custom_call.1']
    #allocation6 [shape = 'u8[32768]{0}', space=vmem, size = 0x8000, scoped, tag = 'output window, operand 0']
    %10 = vsyncpa [#allocation4], 0
    %11 = vsyncpa [#allocation5], 0
    %s12 = scalar_lea.sflag [#allocation5], 1
    %13 = vsyncpa %s12, 0
    loop: start=0, step=1, limit=4
    $region2: #{tpu_custom_call.1} parent=1 // loop_pre_header
      _
    $region3: #{tpu_custom_call.1} parent=1 // loop_header
      %s15 = sphi 0, %s19
      %p16 = scmp.ge.s32.totalorder %s15, 4
      %s25 = sphi 0, %s27
      %s28 = sphi 0, %s25
      %s29 = sphi 0, %s28
      %s45 = sphi 0, %s29
      %s49 = sphi 0, %s49
      %s51 = sphi 0, %s49
      %s52 = sphi 0, %s51
      %s66 = sphi 0, %s52
      %s70 = sphi 0, %s70
      %s72 = sphi 0, %s70
      %s73 = sphi 0, %s72
      %s87 = sphi 0, %s73
      %s91 = sphi 0, %s91
      %s93 = sphi 0, %s91
      %s94 = sphi 0, %s93
      %s108 = sphi 0, %s94
      %s112 = sphi 0, %s112
      %s114 = sphi 0, %s112
      %s115 = sphi 0, %s114
      %s129 = sphi 0, %s115
      %s135 = sphi 0, %s137
      %s138 = sphi 0, %s135
      %s139 = sphi 0, %s138
      %s155 = sphi 0, %s139
    $region4: #{tpu_custom_call.1} parent=1 // loop_header_branch
      %18 = sbr.rel (%p16) target = $region8
    $region5: #{tpu_custom_call.1} parent=1 // loop_body
      %s20 = ssub.s32 %s15, 1
      %s21 = ssub.s32 %s15, 2
      %s22 = sadd.s32 %s15, 1
      %s23 = ssub.s32 %s15, %s22
      %p24 = scmp.eq.s32.totalorder %s23, 0
      %s26 = sadd.s32 %s25, 1
      %s27 = scalar_select %p24, %s25, %s26
      %p30 = pneg %p24
      %p31 = scmp.eq.s32.totalorder %s15, 1
      %p32 = por %p30, %p31
      %p33 = scmp.ne.s32.totalorder %s25, %s28
      %p34 = scmp.eq.s32.totalorder %s15, 0
      %p35 = por %p33, %p34
      %p36 = scmp.ne.s32.totalorder %s25, %s28
      %p37 = scmp.eq.s32.totalorder %s20, 1
      %p38 = por %p36, %p37
      %p39 = scmp.ne.s32.totalorder %s28, %s29
      %p40 = scmp.eq.s32.totalorder %s20, 0
      %p41 = por %p39, %p40
      %p42 = scmp.ne.s32.totalorder %s28, %s29
      %p43 = scmp.eq.s32.totalorder %s21, 1
      %p44 = por %p42, %p43
      %p46 = scmp.ne.s32.totalorder %s29, %s45
      %p47 = scmp.eq.s32.totalorder %s21, 0
      %p48 = por %p46, %p47
      %s50 = sadd.s32 %s49, 1
      %p53 = scmp.eq.s32.totalorder %s15, 1
      %p54 = scmp.ne.s32.totalorder %s49, %s51
      %p55 = scmp.eq.s32.totalorder %s15, 0
      %p56 = por %p54, %p55
      %p57 = scmp.ne.s32.totalorder %s49, %s51
      %p58 = scmp.eq.s32.totalorder %s20, 1
      %p59 = por %p57, %p58
      %p60 = scmp.ne.s32.totalorder %s51, %s52
      %p61 = scmp.eq.s32.totalorder %s20, 0
      %p62 = por %p60, %p61
      %p63 = scmp.ne.s32.totalorder %s51, %s52
      %p64 = scmp.eq.s32.totalorder %s21, 1
      %p65 = por %p63, %p64
      %p67 = scmp.ne.s32.totalorder %s52, %s66
      %p68 = scmp.eq.s32.totalorder %s21, 0
      %p69 = por %p67, %p68
      %s71 = sadd.s32 %s70, 1
      %p74 = scmp.eq.s32.totalorder %s15, 1
      %p75 = scmp.ne.s32.totalorder %s70, %s72
      %p76 = scmp.eq.s32.totalorder %s15, 0
      %p77 = por %p75, %p76
      %p78 = scmp.ne.s32.totalorder %s70, %s72
      %p79 = scmp.eq.s32.totalorder %s20, 1
      %p80 = por %p78, %p79
      %p81 = scmp.ne.s32.totalorder %s72, %s73
      %p82 = scmp.eq.s32.totalorder %s20, 0
      %p83 = por %p81, %p82
      %p84 = scmp.ne.s32.totalorder %s72, %s73
      %p85 = scmp.eq.s32.totalorder %s21, 1
      %p86 = por %p84, %p85
      %p88 = scmp.ne.s32.totalorder %s73, %s87
      %p89 = scmp.eq.s32.totalorder %s21, 0
      %p90 = por %p88, %p89
      %s92 = sadd.s32 %s91, 1
      %p95 = scmp.eq.s32.totalorder %s15, 1
      %p96 = scmp.ne.s32.totalorder %s91, %s93
      %p97 = scmp.eq.s32.totalorder %s15, 0
      %p98 = por %p96, %p97
      %p99 = scmp.ne.s32.totalorder %s91, %s93
      %p100 = scmp.eq.s32.totalorder %s20, 1
      %p101 = por %p99, %p100
      %p102 = scmp.ne.s32.totalorder %s93, %s94
      %p103 = scmp.eq.s32.totalorder %s20, 0
      %p104 = por %p102, %p103
      %p105 = scmp.ne.s32.totalorder %s93, %s94
      %p106 = scmp.eq.s32.totalorder %s21, 1
      %p107 = por %p105, %p106
      %p109 = scmp.ne.s32.totalorder %s94, %s108
      %p110 = scmp.eq.s32.totalorder %s21, 0
      %p111 = por %p109, %p110
      %s113 = sadd.s32 %s112, 1
      %p116 = scmp.eq.s32.totalorder %s15, 1
      %p117 = scmp.ne.s32.totalorder %s112, %s114
      %p118 = scmp.eq.s32.totalorder %s15, 0
      %p119 = por %p117, %p118
      %p120 = scmp.ne.s32.totalorder %s112, %s114
      %p121 = scmp.eq.s32.totalorder %s20, 1
      %p122 = por %p120, %p121
      %p123 = scmp.ne.s32.totalorder %s114, %s115
      %p124 = scmp.eq.s32.totalorder %s20, 0
      %p125 = por %p123, %p124
      %p126 = scmp.ne.s32.totalorder %s114, %s115
      %p127 = scmp.eq.s32.totalorder %s21, 1
      %p128 = por %p126, %p127
      %p130 = scmp.ne.s32.totalorder %s115, %s129
      %p131 = scmp.eq.s32.totalorder %s21, 0
      %p132 = por %p130, %p131
      %s133 = ssub.s32 %s15, %s22
      %p134 = scmp.eq.s32.totalorder %s133, 0
      %s136 = sadd.s32 %s135, 1
      %s137 = scalar_select %p134, %s135, %s136
      %p140 = pneg %p134
      %p141 = scmp.eq.s32.totalorder %s15, 1
      %p142 = por %p140, %p141
      %p143 = scmp.ne.s32.totalorder %s135, %s138
      %p144 = scmp.eq.s32.totalorder %s15, 0
      %p145 = por %p143, %p144
      %p146 = scmp.ne.s32.totalorder %s135, %s138
      %p147 = scmp.eq.s32.totalorder %s20, 1
      %p148 = por %p146, %p147
      %p149 = scmp.ne.s32.totalorder %s138, %s139
      %p150 = scmp.eq.s32.totalorder %s20, 0
      %p151 = por %p149, %p150
      %p152 = scmp.ne.s32.totalorder %s138, %s139
      %p153 = scmp.eq.s32.totalorder %s21, 1
      %p154 = por %p152, %p153
      %p156 = scmp.ne.s32.totalorder %s139, %s155
      %p157 = scmp.eq.s32.totalorder %s21, 0
      %p158 = por %p156, %p157
      %p159 = scmp.le.s32.totalorder 1, %s15
      %p160 = scmp.lt.s32.totalorder %s15, 3
      %p161 = pnand %p159, %p160
      %p162 = pneg %p161
      // Predicated region
      $region9: #{tpu_custom_call.1} parent=5 // pred_check
        _
      $region10: #{tpu_custom_call.1} parent=5 // pred_check_branch
        %164 = sbr.rel (%p161) target = $region12
      $region11: #{tpu_custom_call.1} parent=5 // pred_region
        %s165 = ssub.s32 %s15, 1
        // Predicated region
        $region13: #{tpu_custom_call.1} parent=11 // pred_check
          %p166 = pneg %p62
        $region14: #{tpu_custom_call.1} parent=11 // pred_check_branch
          %168 = sbr.rel (%p166) target = $region16
        $region15: #{tpu_custom_call.1} parent=11 // pred_region
          _
        $region16: #{tpu_custom_call.1} parent=11 // pred_fallthru
          _
        // Predicated region
        $region17: #{tpu_custom_call.1} parent=11 // pred_check
          %p169 = pneg %p83
        $region18: #{tpu_custom_call.1} parent=11 // pred_check_branch
          %171 = sbr.rel (%p169) target = $region20
        $region19: #{tpu_custom_call.1} parent=11 // pred_region
          %s173 = ssub.s32 2048, 2048
          %174 = vsyncadd [#allocation4], %s173
          %s175 = sshll.u32 [#allocation3], 4
          %s176 = int_to_ptr.vmem [resolvable:$true] %s175
          %181 = dma.hbm_to_vmem [thread:$0]  %s2, 2048, %s176, [#allocation4], 128, 128, 8
        $region20: #{tpu_custom_call.1} parent=11 // pred_fallthru
          _
        // Predicated region
        $region21: #{tpu_custom_call.1} parent=11 // pred_check
          %p182 = pneg %p104
        $region22: #{tpu_custom_call.1} parent=11 // pred_check_branch
          %184 = sbr.rel (%p182) target = $region24
        $region23: #{tpu_custom_call.1} parent=11 // pred_region
          _
        $region24: #{tpu_custom_call.1} parent=11 // pred_fallthru
          _
        // Predicated region
        $region25: #{tpu_custom_call.1} parent=11 // pred_check
          %p185 = pneg %p125
        $region26: #{tpu_custom_call.1} parent=11 // pred_check_branch
          %187 = sbr.rel (%p185) target = $region28
        $region27: #{tpu_custom_call.1} parent=11 // pred_region
          _
        $region28: #{tpu_custom_call.1} parent=11 // pred_fallthru
          _
      $region12: #{tpu_custom_call.1} parent=5 // pred_fallthru
        _
      %p188 = scmp.lt.s32.totalorder %s15, 2
      // Predicated region
      $region29: #{tpu_custom_call.1} parent=5 // pred_check
        %p189 = pneg %p188
      $region30: #{tpu_custom_call.1} parent=5 // pred_check_branch
        %191 = sbr.rel (%p189) target = $region32
      $region31: #{tpu_custom_call.1} parent=5 // pred_region
        // Predicated region
        $region33: #{tpu_custom_call.1} parent=31 // pred_check
          %p192 = pneg %p35
        $region34: #{tpu_custom_call.1} parent=31 // pred_check_branch
          %194 = sbr.rel (%p192) target = $region36
        $region35: #{tpu_custom_call.1} parent=31 // pred_region
          %p195 = scmp.lt.s32.totalorder %s15, 1
          %s196 = scalar_select %p195, %s15, 1
          %s197 = smul.addr %s196, 11
          %s198 = smul.addr %s197, 4
          %s199 = scalar_lea.vmem %s0, %s198
        $region36: #{tpu_custom_call.1} parent=31 // pred_fallthru
          _
      $region32: #{tpu_custom_call.1} parent=5 // pred_fallthru
        _
      %p200 = scmp.le.s32.totalorder 1, %s15
      %p201 = scmp.lt.s32.totalorder %s15, 3
      %p202 = pnand %p200, %p201
      %p203 = pneg %p202
      // Predicated region
      $region37: #{tpu_custom_call.1} parent=5 // pred_check
        _
      $region38: #{tpu_custom_call.1} parent=5 // pred_check_branch
        %205 = sbr.rel (%p202) target = $region40
      $region39: #{tpu_custom_call.1} parent=5 // pred_region
        %s206 = ssub.s32 %s15, 1
        // Predicated region
        $region41: #{tpu_custom_call.1} parent=39 // pred_check
          %p207 = pneg %p83
        $region42: #{tpu_custom_call.1} parent=39 // pred_check_branch
          %209 = sbr.rel (%p207) target = $region44
        $region43: #{tpu_custom_call.1} parent=39 // pred_region
          %210 = dma.done [#allocation4], 2048
        $region44: #{tpu_custom_call.1} parent=39 // pred_fallthru
          _
        %p211 = scmp.lt.s32.totalorder %s20, 1
        %s212 = scalar_select %p211, %s20, 1
        %s213 = smul.addr %s212, 11
        %s214 = smul.addr %s213, 4
        %s215 = scalar_lea.vmem %s0, %s214
        %p216 = pneg %p41
        %p217 = pneg %p38
        %p218 = pneg %p62
        %p219 = pneg %p59
        %p220 = pneg %p83
        %p221 = pneg %p80
        %p222 = pneg %p104
        %p223 = pneg %p101
        %p224 = pneg %p125
        %p225 = pneg %p122
        %p226 = pneg %p151
        %p227 = pneg %p148
        %s228 = sand.u32 %s138, 1
        %s229 = scalar_lea.sflag [#allocation5], %s228
        %s230 = sand.u32 %s138, 1
        %s231 = smul.addr %s230, 32
        %s232 = scalar_lea.vmem [#allocation6], %s231
        %p233 = scmp.lt.s32.totalorder %s20, 1
        %s234 = scalar_select %p233, %s20, 1
        %s235 = smul.addr %s234, 11
        %s236 = smul.addr %s235, 4
        %s237 = scalar_lea.vmem %s0, %s236
        %v241 = vlaneseq
        %v242 = vshrl.u32 %v241, 7
        %v243 = vadd.s32 %v242, 8
        %v244 = vadd.s32 %v242, 16
        %v245 = vadd.s32 %v242, 24
        %v246 = vadd.s32 %v242, 32
        %v247 = vadd.s32 %v242, 40
        %v248 = vadd.s32 %v242, 48
        %v249 = vadd.s32 %v242, 56
        %vm250 = vcmp.lt.s32.totalorder %v242, 0
        %v251 = vsub.s32 0, %v242
        %v252 = vsel %vm250, %v251, %v242
        %v253 = vshrl.u32 %v252, 3
        %v254 = vand.u32 %v252, 7
        %v255 = vsub.s32 0, %v254
        %v256 = vsel %vm250, %v255, %v254
        %vm257 = vcmp.lt.s32.totalorder %v243, 0
        %v258 = vsub.s32 0, %v243
        %v259 = vsel %vm257, %v258, %v243
        %v260 = vshrl.u32 %v259, 3
        %v261 = vand.u32 %v259, 7
        %v262 = vsub.s32 0, %v261
        %v263 = vsel %vm257, %v262, %v261
        %vm264 = vcmp.lt.s32.totalorder %v244, 0
        %v265 = vsub.s32 0, %v244
        %v266 = vsel %vm264, %v265, %v244
        %v267 = vshrl.u32 %v266, 3
        %v268 = vand.u32 %v266, 7
        %v269 = vsub.s32 0, %v268
        %v270 = vsel %vm264, %v269, %v268
        %vm271 = vcmp.lt.s32.totalorder %v245, 0
        %v272 = vsub.s32 0, %v245
        %v273 = vsel %vm271, %v272, %v245
        %v274 = vshrl.u32 %v273, 3
        %v275 = vand.u32 %v273, 7
        %v276 = vsub.s32 0, %v275
        %v277 = vsel %vm271, %v276, %v275
        %vm278 = vcmp.lt.s32.totalorder %v246, 0
        %v279 = vsub.s32 0, %v246
        %v280 = vsel %vm278, %v279, %v246
        %v281 = vshrl.u32 %v280, 3
        %v282 = vand.u32 %v280, 7
        %v283 = vsub.s32 0, %v282
        %v284 = vsel %vm278, %v283, %v282
        %vm285 = vcmp.lt.s32.totalorder %v247, 0
        %v286 = vsub.s32 0, %v247
        %v287 = vsel %vm285, %v286, %v247
        %v288 = vshrl.u32 %v287, 3
        %v289 = vand.u32 %v287, 7
        %v290 = vsub.s32 0, %v289
        %v291 = vsel %vm285, %v290, %v289
        %vm292 = vcmp.lt.s32.totalorder %v248, 0
        %v293 = vsub.s32 0, %v248
        %v294 = vsel %vm292, %v293, %v248
        %v295 = vshrl.u32 %v294, 3
        %v296 = vand.u32 %v294, 7
        %v297 = vsub.s32 0, %v296
        %v298 = vsel %vm292, %v297, %v296
        %vm299 = vcmp.lt.s32.totalorder %v249, 0
        %v300 = vsub.s32 0, %v249
        %v301 = vsel %vm299, %v300, %v249
        %v302 = vshrl.u32 %v301, 3
        %v303 = vand.u32 %v301, 7
        %v304 = vsub.s32 0, %v303
        %v305 = vsel %vm299, %v304, %v303
        %vm306 = vcmp.ne.s32.totalorder %v256, 0
        %vm307 = vcmp.ne.s32.totalorder %v263, 0
        %vm308 = vcmp.ne.s32.totalorder %v270, 0
        %vm309 = vcmp.ne.s32.totalorder %v277, 0
        %vm310 = vcmp.ne.s32.totalorder %v284, 0
        %vm311 = vcmp.ne.s32.totalorder %v291, 0
        %vm312 = vcmp.ne.s32.totalorder %v298, 0
        %vm313 = vcmp.ne.s32.totalorder %v305, 0
        %vm314 = vcmp.lt.s32.totalorder %v256, 0
        %vm315 = vcmp.lt.s32.totalorder %v263, 0
        %vm316 = vcmp.lt.s32.totalorder %v270, 0
        %vm317 = vcmp.lt.s32.totalorder %v277, 0
        %vm318 = vcmp.lt.s32.totalorder %v284, 0
        %vm319 = vcmp.lt.s32.totalorder %v291, 0
        %vm320 = vcmp.lt.s32.totalorder %v298, 0
        %vm321 = vcmp.lt.s32.totalorder %v305, 0
        %vm322 = vmand %vm314, %vm306
        %vm323 = vmand %vm315, %vm307
        %vm324 = vmand %vm316, %vm308
        %vm325 = vmand %vm317, %vm309
        %vm326 = vmand %vm318, %vm310
        %vm327 = vmand %vm319, %vm311
        %vm328 = vmand %vm320, %vm312
        %vm329 = vmand %vm321, %vm313
        %v330 = vadd.s32 %v256, 8
        %v331 = vadd.s32 %v263, 8
        %v332 = vadd.s32 %v270, 8
        %v333 = vadd.s32 %v277, 8
        %v334 = vadd.s32 %v284, 8
        %v335 = vadd.s32 %v291, 8
        %v336 = vadd.s32 %v298, 8
        %v337 = vadd.s32 %v305, 8
        %v338 = vsel %vm322, %v330, %v256
        %v339 = vsel %vm323, %v331, %v263
        %v340 = vsel %vm324, %v332, %v270
        %v341 = vsel %vm325, %v333, %v277
        %v342 = vsel %vm326, %v334, %v284
        %v343 = vsel %vm327, %v335, %v291
        %v344 = vsel %vm328, %v336, %v298
        %v345 = vsel %vm329, %v337, %v305
        %vm346 = vcmp.gt.s32.totalorder %v338, 0
        %vm347 = vcmp.gt.s32.totalorder %v339, 0
        %vm348 = vcmp.gt.s32.totalorder %v340, 0
        %vm349 = vcmp.gt.s32.totalorder %v341, 0
        %vm350 = vcmp.gt.s32.totalorder %v342, 0
        %vm351 = vcmp.gt.s32.totalorder %v343, 0
        %vm352 = vcmp.gt.s32.totalorder %v344, 0
        %vm353 = vcmp.gt.s32.totalorder %v345, 0
        %vm354 = vcmp.lt.s32.totalorder %v338, 7
        %vm355 = vcmp.lt.s32.totalorder %v339, 7
        %vm356 = vcmp.lt.s32.totalorder %v340, 7
        %vm357 = vcmp.lt.s32.totalorder %v341, 7
        %vm358 = vcmp.lt.s32.totalorder %v342, 7
        %vm359 = vcmp.lt.s32.totalorder %v343, 7
        %vm360 = vcmp.lt.s32.totalorder %v344, 7
        %vm361 = vcmp.lt.s32.totalorder %v345, 7
        %v362 = vld [vmem:[%s237] sm:$0xf]
        %v363 = vld [vmem:[%s237 + $0x4] sm:$0xf]
        %v364 = vld [vmem:[%s237 + $0x8] sm:$0xf]
        %v365 = vld [vmem:[%s237 + $0xc] sm:$0xf]
        %v366 = vld [vmem:[%s237 + $0x10] sm:$0xf]
        %v367 = vld [vmem:[%s237 + $0x14] sm:$0xf]
        %v368 = vld [vmem:[%s237 + $0x18] sm:$0xf]
        %v369 = vld [vmem:[%s237 + $0x1c] sm:$0xf]
        %v370 = vsel %vm346, 1, 0
        %v371 = vsel %vm347, 1, 0
        %v372 = vsel %vm348, 1, 0
        %v373 = vsel %vm349, 1, 0
        %v374 = vsel %vm350, 1, 0
        %v375 = vsel %vm351, 1, 0
        %v376 = vsel %vm352, 1, 0
        %v377 = vsel %vm353, 1, 0
        %vm378 = vcmp.eq.s32.totalorder %v370, 1
        %vm379 = vcmp.eq.s32.totalorder %v371, 1
        %vm380 = vcmp.eq.s32.totalorder %v372, 1
        %vm381 = vcmp.eq.s32.totalorder %v373, 1
        %vm382 = vcmp.eq.s32.totalorder %v374, 1
        %vm383 = vcmp.eq.s32.totalorder %v375, 1
        %vm384 = vcmp.eq.s32.totalorder %v376, 1
        %vm385 = vcmp.eq.s32.totalorder %v377, 1
        %vm386 = vmpackc.low %vm378, %vm378
        %vm387 = vmpackc.low %vm379, %vm379
        %vm388 = vmpackc.low %vm380, %vm380
        %vm389 = vmpackc.low %vm381, %vm381
        %vm390 = vmpackc.low %vm382, %vm382
        %vm391 = vmpackc.low %vm383, %vm383
        %vm392 = vmpackc.low %vm384, %vm384
        %vm393 = vmpackc.low %vm385, %vm385
        %v394 = vsel %vm386, %v362, 0
        %v395 = vsel %vm387, %v363, 0
        %v396 = vsel %vm388, %v364, 0
        %v397 = vsel %vm389, %v365, 0
        %v398 = vsel %vm390, %v366, 0
        %v399 = vsel %vm391, %v367, 0
        %v400 = vsel %vm392, %v368, 0
        %v401 = vsel %vm393, %v369, 0
        %v402 = vld [vmem:[%s237 + $0x20] sm:$0x1]
        %v403 = vld [vmem:[%s237] sm:$0xe]
        %v404 = vsel %vm354, 1, 0
        %v405 = vsel %vm355, 1, 0
        %v406 = vsel %vm356, 1, 0
        %v407 = vsel %vm357, 1, 0
        %v408 = vsel %vm358, 1, 0
        %v409 = vsel %vm359, 1, 0
        %v410 = vsel %vm360, 1, 0
        %v411 = vsel %vm361, 1, 0
        %vm412 = vcmp.eq.s32.totalorder %v404, 1
        %vm413 = vcmp.eq.s32.totalorder %v405, 1
        %vm414 = vcmp.eq.s32.totalorder %v406, 1
        %vm415 = vcmp.eq.s32.totalorder %v407, 1
        %vm416 = vcmp.eq.s32.totalorder %v408, 1
        %vm417 = vcmp.eq.s32.totalorder %v409, 1
        %vm418 = vcmp.eq.s32.totalorder %v410, 1
        %vm419 = vcmp.eq.s32.totalorder %v411, 1
        %vm420 = vmpackc.low %vm412, %vm412
        %vm421 = vmpackc.low %vm413, %vm413
        %vm422 = vmpackc.low %vm414, %vm414
        %vm423 = vmpackc.low %vm415, %vm415
        %vm424 = vmpackc.low %vm416, %vm416
        %vm425 = vmpackc.low %vm417, %vm417
        %vm426 = vmpackc.low %vm418, %vm418
        %vm427 = vmpackc.low %vm419, %vm419
        %v428 = vsel %vm420, 65537, 0
        %v429 = vsel %vm421, 65537, 0
        %v430 = vsel %vm422, 65537, 0
        %v431 = vsel %vm423, 65537, 0
        %v432 = vsel %vm424, 65537, 0
        %v433 = vsel %vm425, 65537, 0
        %v434 = vsel %vm426, 65537, 0
        %v435 = vsel %vm427, 65537, 0
        %vm436 = vcmask 1040384
        %vm437 = vcmask 1044484
        %vm438 = vmor %vm436, %vm437
        %v439 = vrot.slane %v428, 7
        %v440 = vrot.slane %v439, 4
        %v441 = vrot.slane %v429, 7
        %v442 = vsel %vm438, %v440, %v441
        %v443 = vrot.slane %v441, 4
        %v444 = vrot.slane %v430, 7
        %v445 = vsel %vm438, %v443, %v444
        %v446 = vrot.slane %v444, 4
        %v447 = vrot.slane %v431, 7
        %v448 = vsel %vm438, %v446, %v447
        %v449 = vrot.slane %v447, 4
        %v450 = vrot.slane %v432, 7
        %v451 = vsel %vm438, %v449, %v450
        %v452 = vrot.slane %v450, 4
        %v453 = vrot.slane %v433, 7
        %v454 = vsel %vm438, %v452, %v453
        %v455 = vrot.slane %v453, 4
        %v456 = vrot.slane %v434, 7
        %v457 = vsel %vm438, %v455, %v456
        %v458 = vrot.slane %v456, 4
        %v459 = vrot.slane %v435, 7
        %v460 = vsel %vm438, %v458, %v459
        %v461 = vrot.slane %v459, 4
        %vm462 = vcmp.ne.s16.totalorder %v439, 0
        %vm463 = vcmp.ne.s16.totalorder %v442, 0
        %vm464 = vcmp.ne.s16.totalorder %v445, 0
        %vm465 = vcmp.ne.s16.totalorder %v448, 0
        %vm466 = vcmp.ne.s16.totalorder %v451, 0
        %vm467 = vcmp.ne.s16.totalorder %v454, 0
        %vm468 = vcmp.ne.s16.totalorder %v457, 0
        %vm469 = vcmp.ne.s16.totalorder %v460, 0
        %vm470 = vcmp.ne.s16.totalorder %v461, 0
        %v471 = vsel %vm462, %v403, 0
        %v472 = vsel %vm463, %v363, 0
        %v473 = vsel %vm464, %v364, 0
        %v474 = vsel %vm465, %v365, 0
        %v475 = vsel %vm466, %v366, 0
        %v476 = vsel %vm467, %v367, 0
        %v477 = vsel %vm468, %v368, 0
        %v478 = vsel %vm469, %v369, 0
        %v479 = vsel %vm470, %v402, 0
        %v480 = vld [vmem:[%s237 + $0x20] sm:$0xf]
        %v481 = vsel %vm386, %v363, 0
        %v482 = vsel %vm387, %v364, 0
        %v483 = vsel %vm388, %v365, 0
        %v484 = vsel %vm389, %v366, 0
        %v485 = vsel %vm390, %v367, 0
        %v486 = vsel %vm391, %v368, 0
        %v487 = vsel %vm392, %v369, 0
        %v488 = vsel %vm393, %v480, 0
        %v489 = vld [vmem:[%s237 + $0x24] sm:$0x1]
        %v490 = vld [vmem:[%s237 + $0x4] sm:$0xe]
        %v491 = vsel %vm462, %v490, 0
        %v492 = vsel %vm463, %v364, 0
        %v493 = vsel %vm464, %v365, 0
        %v494 = vsel %vm465, %v366, 0
        %v495 = vsel %vm466, %v367, 0
        %v496 = vsel %vm467, %v368, 0
        %v497 = vsel %vm468, %v369, 0
        %v498 = vsel %vm469, %v480, 0
        %v499 = vsel %vm470, %v489, 0
        %v500 = vld [vmem:[%s237 + $0x24] sm:$0xf]
        %v501 = vsel %vm386, %v364, 0
        %v502 = vsel %vm387, %v365, 0
        %v503 = vsel %vm388, %v366, 0
        %v504 = vsel %vm389, %v367, 0
        %v505 = vsel %vm390, %v368, 0
        %v506 = vsel %vm391, %v369, 0
        %v507 = vsel %vm392, %v480, 0
        %v508 = vsel %vm393, %v500, 0
        %v509 = vld [vmem:[%s237 + $0x28] sm:$0x1]
        %v510 = vld [vmem:[%s237 + $0x8] sm:$0xe]
        %v511 = vsel %vm462, %v510, 0
        %v512 = vsel %vm463, %v365, 0
        %v513 = vsel %vm464, %v366, 0
        %v514 = vsel %vm465, %v367, 0
        %v515 = vsel %vm466, %v368, 0
        %v516 = vsel %vm467, %v369, 0
        %v517 = vsel %vm468, %v480, 0
        %v518 = vsel %vm469, %v500, 0
        %v519 = vsel %vm470, %v509, 0
        %v520 = vld [vmem:[%s1] sm:$0x3]
        %v521 = vld [vmem:[%s1] sm:$0xc]
        %v531 = vunpack.c.l.b16 %v362
        %v532 = vunpack.c.l.b16 %v363
        %v533 = vunpack.c.l.b16 %v364
        %v534 = vunpack.c.l.b16 %v365
        %v535 = vunpack.c.l.b16 %v366
        %v536 = vunpack.c.l.b16 %v367
        %v537 = vunpack.c.l.b16 %v368
        %v538 = vunpack.c.l.b16 %v369
        %v539 = vunpack.c.l.b16 %v402
        %v540 = vpack.c.b16 %v532, %v531
        %v541 = vpack.c.b16 %v534, %v533
        %v542 = vpack.c.b16 %v536, %v535
        %v543 = vpack.c.b16 %v538, %v537
        %v544 = vpack.c.b16 %v539, %v539
        %vm545 = vsmask.f32 7424
        %v547 = vshrl.u32 %v540, 16
        %v549 = vshll.u32 %v540, 16
        %v551 = vrot.slane %v549, 1
        %v552 = vor.u32 %v547, %v551
        %v554 = vshll.u32 %v541, 16
        %v556 = vrot.slane %v554, 1
        %v557 = vsel %vm545, %v552, %v556
        %v558 = vshrl.u32 %v541, 16
        %v560 = vor.u32 %v558, %v556
        %v562 = vshll.u32 %v542, 16
        %v564 = vrot.slane %v562, 1
        %v565 = vsel %vm545, %v560, %v564
        %v566 = vshrl.u32 %v542, 16
        %v568 = vor.u32 %v566, %v564
        %v570 = vshll.u32 %v543, 16
        %v572 = vrot.slane %v570, 1
        %v573 = vsel %vm545, %v568, %v572
        %v574 = vshrl.u32 %v543, 16
        %v576 = vor.u32 %v574, %v572
        %v578 = vshll.u32 %v544, 16
        %v580 = vrot.slane %v578, 1
        %v581 = vsel %vm545, %v576, %v580
        %v583 = vunpack.c.l.b16 %v521
        %v584 = vpack.c.b16 %v583, %v583
        %v585 = vrot.slane %v584, 2
        %vm586 = vcmask 31744
        %v588 = vsel %vm586, %v557, 0
        %v591 = vsel %vm586, %v565, 0
        %v594 = vsel %vm586, %v573, 0
        %v597 = vsel %vm586, %v581, 0
        %vm599 = vcmask 1041408
        %v601 = vsel %vm599, %v585, 0
        %603 = vmatprep.subr.bf16.mxu0 0
        %604 = vmatpush1.bf16.msra.mxu0 %v601
        %605 = vmatprep.subr.bf16.mxu0 0
        %606 = vmatpush1.bf16.msra.mxu0 0
        %607 = vmatprep.subr.bf16.mxu0 0
        %608 = vmatpush1.bf16.msra.mxu0 0
        %609 = vmatprep.subr.bf16.mxu0 0
        %610 = vmatpush1.bf16.msra.mxu0 0
        %611 = vmatprep.subr.bf16.mxu0 0
        %612 = vmatpush1.bf16.msra.mxu0 0
        %613 = vmatprep.subr.bf16.mxu0 0
        %614 = vmatpush1.bf16.msra.mxu0 0
        %615 = vmatprep.subr.bf16.mxu0 0
        %616 = vmatpush1.bf16.msra.mxu0 0
        %617 = vmatprep.subr.bf16.mxu0 0
        %618 = vmatpush1.bf16.msra.mxu0 0
        %619 = vmatprep.subr.bf16.mxu0 0
        %620 = vmatpush1.bf16.msra.mxu0 0
        %621 = vmatprep.subr.bf16.mxu0 0
        %622 = vmatpush1.bf16.msra.mxu0 0
        %623 = vmatprep.subr.bf16.mxu0 0
        %624 = vmatpush1.bf16.msra.mxu0 0
        %625 = vmatprep.subr.bf16.mxu0 0
        %626 = vmatpush1.bf16.msra.mxu0 0
        %627 = vmatprep.subr.bf16.mxu0 0
        %628 = vmatpush1.bf16.msra.mxu0 0
        %629 = vmatprep.subr.bf16.mxu0 0
        %630 = vmatpush1.bf16.msra.mxu0 0
        %631 = vmatprep.subr.bf16.mxu0 0
        %632 = vmatpush1.bf16.msra.mxu0 0
        %633 = vmatprep.subr.bf16.mxu0 0
        %634 = vmatpush1.bf16.msra.mxu0 0
        %635 = vmatprep.mubr.bf16.mxu0 0
        %636 = vmatmul.mubr.bf16.gmra.mrb[0].mxu0 %v588
        %v637 = vpop.f32.mrb[0].mxu0
        %v638 = vadd.f32 0.0, %v637
        %v639 = vpop.f32.mrb[0].mxu0
        %v640 = vpop.f32.mrb[0].mxu0
        %v641 = vadd.f32 0.0, %v640
        %v642 = vpop.f32.mrb[0].mxu0
        %643 = vmatprep.mubr.bf16.mxu0 0
        %644 = vmatmul.mubr.bf16.gmra.mrb[0].mxu0 %v591
        %v645 = vpop.f32.mrb[0].mxu0
        %v646 = vadd.f32 0.0, %v645
        %v647 = vpop.f32.mrb[0].mxu0
        %v648 = vpop.f32.mrb[0].mxu0
        %v649 = vadd.f32 0.0, %v648
        %v650 = vpop.f32.mrb[0].mxu0
        %651 = vmatprep.mubr.bf16.mxu0 0
        %652 = vmatmul.mubr.bf16.gmra.mrb[0].mxu0 %v594
        %v653 = vpop.f32.mrb[0].mxu0
        %v654 = vadd.f32 0.0, %v653
        %v655 = vpop.f32.mrb[0].mxu0
        %v656 = vpop.f32.mrb[0].mxu0
        %v657 = vadd.f32 0.0, %v656
        %v658 = vpop.f32.mrb[0].mxu0
        %659 = vmatprep.mubr.bf16.mxu0 0
        %660 = vmatmul.mubr.bf16.gmra.mrb[0].mxu0 %v597
        %v661 = vpop.f32.mrb[0].mxu0
        %v662 = vadd.f32 0.0, %v661
        %v663 = vpop.f32.mrb[0].mxu0
        %v664 = vpop.f32.mrb[0].mxu0
        %v665 = vadd.f32 0.0, %v664
        %v666 = vpop.f32.mrb[0].mxu0
        %667 = vdwg.mxu0
        %v676 = vunpack.c.l.b16 %v394
        %v677 = vunpack.c.l.b16 %v395
        %v678 = vunpack.c.l.b16 %v396
        %v679 = vunpack.c.l.b16 %v397
        %v680 = vunpack.c.l.b16 %v398
        %v681 = vunpack.c.l.b16 %v399
        %v682 = vunpack.c.l.b16 %v400
        %v683 = vunpack.c.l.b16 %v401
        %v684 = vpack.c.b16 %v677, %v676
        %v685 = vpack.c.b16 %v679, %v678
        %v686 = vpack.c.b16 %v681, %v680
        %v687 = vpack.c.b16 %v683, %v682
        %v689 = vsel %vm586, %v684, 0
        %v692 = vsel %vm586, %v685, 0
        %v695 = vsel %vm586, %v686, 0
        %v698 = vsel %vm586, %v687, 0
        %v701 = vsel %vm599, %v520, 0
        %703 = vmatprep.subr.bf16.mxu0 0
        %704 = vmatpush1.bf16.msra.mxu0 %v701
        %705 = vmatprep.subr.bf16.mxu0 0
        %706 = vmatpush1.bf16.msra.mxu0 0
        %707 = vmatprep.subr.bf16.mxu0 0
        %708 = vmatpush1.bf16.msra.mxu0 0
        %709 = vmatprep.subr.bf16.mxu0 0
        %710 = vmatpush1.bf16.msra.mxu0 0
        %711 = vmatprep.subr.bf16.mxu0 0
        %712 = vmatpush1.bf16.msra.mxu0 0
        %713 = vmatprep.subr.bf16.mxu0 0
        %714 = vmatpush1.bf16.msra.mxu0 0
        %715 = vmatprep.subr.bf16.mxu0 0
        %716 = vmatpush1.bf16.msra.mxu0 0
        %717 = vmatprep.subr.bf16.mxu0 0
        %718 = vmatpush1.bf16.msra.mxu0 0
        %719 = vmatprep.subr.bf16.mxu0 0
        %720 = vmatpush1.bf16.msra.mxu0 0
        %721 = vmatprep.subr.bf16.mxu0 0
        %722 = vmatpush1.bf16.msra.mxu0 0
        %723 = vmatprep.subr.bf16.mxu0 0
        %724 = vmatpush1.bf16.msra.mxu0 0
        %725 = vmatprep.subr.bf16.mxu0 0
        %726 = vmatpush1.bf16.msra.mxu0 0
        %727 = vmatprep.subr.bf16.mxu0 0
        %728 = vmatpush1.bf16.msra.mxu0 0
        %729 = vmatprep.subr.bf16.mxu0 0
        %730 = vmatpush1.bf16.msra.mxu0 0
        %731 = vmatprep.subr.bf16.mxu0 0
        %732 = vmatpush1.bf16.msra.mxu0 0
        %733 = vmatprep.subr.bf16.mxu0 0
        %734 = vmatpush1.bf16.msra.mxu0 0
        %735 = vmatprep.mubr.bf16.mxu0 0
        %736 = vmatmul.mubr.bf16.gmra.mrb[0].mxu0 %v689
        %v737 = vpop.f32.mrb[0].mxu0
        %v738 = vadd.f32 %v638, %v737
        %v739 = vpop.f32.mrb[0].mxu0
        %v740 = vpop.f32.mrb[0].mxu0
        %v741 = vadd.f32 %v641, %v740
        %v742 = vpop.f32.mrb[0].mxu0
        %743 = vmatprep.mubr.bf16.mxu0 0
        %744 = vmatmul.mubr.bf16.gmra.mrb[0].mxu0 %v692
        %v745 = vpop.f32.mrb[0].mxu0
        %v746 = vadd.f32 %v646, %v745
        %v747 = vpop.f32.mrb[0].mxu0
        %v748 = vpop.f32.mrb[0].mxu0
        %v749 = vadd.f32 %v649, %v748
        %v750 = vpop.f32.mrb[0].mxu0
        %751 = vmatprep.mubr.bf16.mxu0 0
        %752 = vmatmul.mubr.bf16.gmra.mrb[0].mxu0 %v695
        %v753 = vpop.f32.mrb[0].mxu0
        %v754 = vadd.f32 %v654, %v753
        %v755 = vpop.f32.mrb[0].mxu0
        %v756 = vpop.f32.mrb[0].mxu0
        %v757 = vadd.f32 %v657, %v756
        %v758 = vpop.f32.mrb[0].mxu0
        %759 = vmatprep.mubr.bf16.mxu0 0
        %760 = vmatmul.mubr.bf16.gmra.mrb[0].mxu0 %v698
        %v761 = vpop.f32.mrb[0].mxu0
        %v762 = vadd.f32 %v662, %v761
        %v763 = vpop.f32.mrb[0].mxu0
        %v764 = vpop.f32.mrb[0].mxu0
        %v765 = vadd.f32 %v665, %v764
        %v766 = vpop.f32.mrb[0].mxu0
        %767 = vdwg.mxu0
        %v768 = vld [vmem:[%s1 + $0x4] sm:$0x3]
        %v778 = vunpack.c.l.b16 %v471
        %v779 = vunpack.c.l.b16 %v472
        %v780 = vunpack.c.l.b16 %v473
        %v781 = vunpack.c.l.b16 %v474
        %v782 = vunpack.c.l.b16 %v475
        %v783 = vunpack.c.l.b16 %v476
        %v784 = vunpack.c.l.b16 %v477
        %v785 = vunpack.c.l.b16 %v478
        %v786 = vunpack.c.l.b16 %v479
        %v787 = vpack.c.b16 %v779, %v778
        %v788 = vpack.c.b16 %v781, %v780
        %v789 = vpack.c.b16 %v783, %v782
        %v790 = vpack.c.b16 %v785, %v784
        %v791 = vpack.c.b16 %v786, %v786
        %vm792 = vcmask 1046528
        %v793 = vrot.slane %v787, 1
        %v794 = vrot.slane %v788, 1
        %v795 = vsel %vm792, %v793, %v794
        %v796 = vrot.slane %v789, 1
        %v797 = vsel %vm792, %v794, %v796
        %v798 = vrot.slane %v790, 1
        %v799 = vsel %vm792, %v796, %v798
        %v800 = vrot.slane %v791, 1
        %v801 = vsel %vm792, %v798, %v800
        %v803 = vsel %vm586, %v795, 0
        %v806 = vsel %vm586, %v797, 0
        %v809 = vsel %vm586, %v799, 0
        %v812 = vsel %vm586, %v801, 0
        %v815 = vsel %vm599, %v768, 0
        %817 = vmatprep.subr.bf16.mxu0 0
        %818 = vmatpush1.bf16.msra.mxu0 %v815
        %819 = vmatprep.subr.bf16.mxu0 0
        %820 = vmatpush1.bf16.msra.mxu0 0
        %821 = vmatprep.subr.bf16.mxu0 0
        %822 = vmatpush1.bf16.msra.mxu0 0
        %823 = vmatprep.subr.bf16.mxu0 0
        %824 = vmatpush1.bf16.msra.mxu0 0
        %825 = vmatprep.subr.bf16.mxu0 0
        %826 = vmatpush1.bf16.msra.mxu0 0
        %827 = vmatprep.subr.bf16.mxu0 0
        %828 = vmatpush1.bf16.msra.mxu0 0
        %829 = vmatprep.subr.bf16.mxu0 0
        %830 = vmatpush1.bf16.msra.mxu0 0
        %831 = vmatprep.subr.bf16.mxu0 0
        %832 = vmatpush1.bf16.msra.mxu0 0
        %833 = vmatprep.subr.bf16.mxu0 0
        %834 = vmatpush1.bf16.msra.mxu0 0
        %835 = vmatprep.subr.bf16.mxu0 0
        %836 = vmatpush1.bf16.msra.mxu0 0
        %837 = vmatprep.subr.bf16.mxu0 0
        %838 = vmatpush1.bf16.msra.mxu0 0
        %839 = vmatprep.subr.bf16.mxu0 0
        %840 = vmatpush1.bf16.msra.mxu0 0
        %841 = vmatprep.subr.bf16.mxu0 0
        %842 = vmatpush1.bf16.msra.mxu0 0
        %843 = vmatprep.subr.bf16.mxu0 0
        %844 = vmatpush1.bf16.msra.mxu0 0
        %845 = vmatprep.subr.bf16.mxu0 0
        %846 = vmatpush1.bf16.msra.mxu0 0
        %847 = vmatprep.subr.bf16.mxu0 0
        %848 = vmatpush1.bf16.msra.mxu0 0
        %849 = vmatprep.mubr.bf16.mxu0 0
        %850 = vmatmul.mubr.bf16.gmra.mrb[0].mxu0 %v803
        %v851 = vpop.f32.mrb[0].mxu0
        %v852 = vadd.f32 0.0, %v851
        %v853 = vpop.f32.mrb[0].mxu0
        %v854 = vpop.f32.mrb[0].mxu0
        %v855 = vadd.f32 0.0, %v854
        %v856 = vpop.f32.mrb[0].mxu0
        %857 = vmatprep.mubr.bf16.mxu0 0
        %858 = vmatmul.mubr.bf16.gmra.mrb[0].mxu0 %v806
        %v859 = vpop.f32.mrb[0].mxu0
        %v860 = vadd.f32 0.0, %v859
        %v861 = vpop.f32.mrb[0].mxu0
        %v862 = vpop.f32.mrb[0].mxu0
        %v863 = vadd.f32 0.0, %v862
        %v864 = vpop.f32.mrb[0].mxu0
        %865 = vmatprep.mubr.bf16.mxu0 0
        %866 = vmatmul.mubr.bf16.gmra.mrb[0].mxu0 %v809
        %v867 = vpop.f32.mrb[0].mxu0
        %v868 = vadd.f32 0.0, %v867
        %v869 = vpop.f32.mrb[0].mxu0
        %v870 = vpop.f32.mrb[0].mxu0
        %v871 = vadd.f32 0.0, %v870
        %v872 = vpop.f32.mrb[0].mxu0
        %873 = vmatprep.mubr.bf16.mxu0 0
        %874 = vmatmul.mubr.bf16.gmra.mrb[0].mxu0 %v812
        %v875 = vpop.f32.mrb[0].mxu0
        %v876 = vadd.f32 0.0, %v875
        %v877 = vpop.f32.mrb[0].mxu0
        %v878 = vpop.f32.mrb[0].mxu0
        %v879 = vadd.f32 0.0, %v878
        %v880 = vpop.f32.mrb[0].mxu0
        %881 = vdwg.mxu0
        %v882 = vadd.f32 %v738, %v852
        %v883 = vadd.f32 %v741, %v855
        %v884 = vadd.f32 %v746, %v860
        %v885 = vadd.f32 %v749, %v863
        %v886 = vadd.f32 %v754, %v868
        %v887 = vadd.f32 %v757, %v871
        %v888 = vadd.f32 %v762, %v876
        %v889 = vadd.f32 %v765, %v879
        %v890 = vld [vmem:[%s1 + $0x4] sm:$0xc]
        %v899 = vunpack.c.l.b16 %v481
        %v900 = vunpack.c.l.b16 %v482
        %v901 = vunpack.c.l.b16 %v483
        %v902 = vunpack.c.l.b16 %v484
        %v903 = vunpack.c.l.b16 %v485
        %v904 = vunpack.c.l.b16 %v486
        %v905 = vunpack.c.l.b16 %v487
        %v906 = vunpack.c.l.b16 %v488
        %v907 = vpack.c.b16 %v900, %v899
        %v908 = vpack.c.b16 %v902, %v901
        %v909 = vpack.c.b16 %v904, %v903
        %v910 = vpack.c.b16 %v906, %v905
        %v912 = vunpack.c.l.b16 %v890
        %v913 = vpack.c.b16 %v912, %v912
        %v914 = vrot.slane %v913, 2
        %v916 = vsel %vm586, %v907, 0
        %v919 = vsel %vm586, %v908, 0
        %v922 = vsel %vm586, %v909, 0
        %v925 = vsel %vm586, %v910, 0
        %v928 = vsel %vm599, %v914, 0
        %930 = vmatprep.subr.bf16.mxu0 0
        %931 = vmatpush1.bf16.msra.mxu0 %v928
        %932 = vmatprep.subr.bf16.mxu0 0
        %933 = vmatpush1.bf16.msra.mxu0 0
        %934 = vmatprep.subr.bf16.mxu0 0
        %935 = vmatpush1.bf16.msra.mxu0 0
        %936 = vmatprep.subr.bf16.mxu0 0
        %937 = vmatpush1.bf16.msra.mxu0 0
        %938 = vmatprep.subr.bf16.mxu0 0
        %939 = vmatpush1.bf16.msra.mxu0 0
        %940 = vmatprep.subr.bf16.mxu0 0
        %941 = vmatpush1.bf16.msra.mxu0 0
        %942 = vmatprep.subr.bf16.mxu0 0
        %943 = vmatpush1.bf16.msra.mxu0 0
        %944 = vmatprep.subr.bf16.mxu0 0
        %945 = vmatpush1.bf16.msra.mxu0 0
        %946 = vmatprep.subr.bf16.mxu0 0
        %947 = vmatpush1.bf16.msra.mxu0 0
        %948 = vmatprep.subr.bf16.mxu0 0
        %949 = vmatpush1.bf16.msra.mxu0 0
        %950 = vmatprep.subr.bf16.mxu0 0
        %951 = vmatpush1.bf16.msra.mxu0 0
        %952 = vmatprep.subr.bf16.mxu0 0
        %953 = vmatpush1.bf16.msra.mxu0 0
        %954 = vmatprep.subr.bf16.mxu0 0
        %955 = vmatpush1.bf16.msra.mxu0 0
        %956 = vmatprep.subr.bf16.mxu0 0
        %957 = vmatpush1.bf16.msra.mxu0 0
        %958 = vmatprep.subr.bf16.mxu0 0
        %959 = vmatpush1.bf16.msra.mxu0 0
        %960 = vmatprep.subr.bf16.mxu0 0
        %961 = vmatpush1.bf16.msra.mxu0 0
        %962 = vmatprep.mubr.bf16.mxu0 0
        %963 = vmatmul.mubr.bf16.gmra.mrb[0].mxu0 %v916
        %v964 = vpop.f32.mrb[0].mxu0
        %v965 = vadd.f32 0.0, %v964
        %v966 = vpop.f32.mrb[0].mxu0
        %v967 = vpop.f32.mrb[0].mxu0
        %v968 = vadd.f32 0.0, %v967
        %v969 = vpop.f32.mrb[0].mxu0
        %970 = vmatprep.mubr.bf16.mxu0 0
        %971 = vmatmul.mubr.bf16.gmra.mrb[0].mxu0 %v919
        %v972 = vpop.f32.mrb[0].mxu0
        %v973 = vadd.f32 0.0, %v972
        %v974 = vpop.f32.mrb[0].mxu0
        %v975 = vpop.f32.mrb[0].mxu0
        %v976 = vadd.f32 0.0, %v975
        %v977 = vpop.f32.mrb[0].mxu0
        %978 = vmatprep.mubr.bf16.mxu0 0
        %979 = vmatmul.mubr.bf16.gmra.mrb[0].mxu0 %v922
        %v980 = vpop.f32.mrb[0].mxu0
        %v981 = vadd.f32 0.0, %v980
        %v982 = vpop.f32.mrb[0].mxu0
        %v983 = vpop.f32.mrb[0].mxu0
        %v984 = vadd.f32 0.0, %v983
        %v985 = vpop.f32.mrb[0].mxu0
        %986 = vmatprep.mubr.bf16.mxu0 0
        %987 = vmatmul.mubr.bf16.gmra.mrb[0].mxu0 %v925
        %v988 = vpop.f32.mrb[0].mxu0
        %v989 = vadd.f32 0.0, %v988
        %v990 = vpop.f32.mrb[0].mxu0
        %v991 = vpop.f32.mrb[0].mxu0
        %v992 = vadd.f32 0.0, %v991
        %v993 = vpop.f32.mrb[0].mxu0
        %994 = vdwg.mxu0
        %v995 = vadd.f32 %v882, %v965
        %v996 = vadd.f32 %v883, %v968
        %v997 = vadd.f32 %v884, %v973
        %v998 = vadd.f32 %v885, %v976
        %v999 = vadd.f32 %v886, %v981
        %v1000 = vadd.f32 %v887, %v984
        %v1001 = vadd.f32 %v888, %v989
        %v1002 = vadd.f32 %v889, %v992
        %v1003 = vld [vmem:[%s1 + $0x8] sm:$0x3]
        %v1006 = vunpack.c.l.b16 %v480
        %v1007 = vunpack.c.l.b16 %v489
        %v1008 = vpack.c.b16 %v533, %v532
        %v1009 = vpack.c.b16 %v535, %v534
        %v1010 = vpack.c.b16 %v537, %v536
        %v1011 = vpack.c.b16 %v1006, %v538
        %v1012 = vpack.c.b16 %v1007, %v1007
        %v1014 = vshrl.u32 %v1008, 16
        %v1016 = vshll.u32 %v1008, 16
        %v1018 = vrot.slane %v1016, 1
        %v1019 = vor.u32 %v1014, %v1018
        %v1021 = vshll.u32 %v1009, 16
        %v1023 = vrot.slane %v1021, 1
        %v1024 = vsel %vm545, %v1019, %v1023
        %v1025 = vshrl.u32 %v1009, 16
        %v1027 = vor.u32 %v1025, %v1023
        %v1029 = vshll.u32 %v1010, 16
        %v1031 = vrot.slane %v1029, 1
        %v1032 = vsel %vm545, %v1027, %v1031
        %v1033 = vshrl.u32 %v1010, 16
        %v1035 = vor.u32 %v1033, %v1031
        %v1037 = vshll.u32 %v1011, 16
        %v1039 = vrot.slane %v1037, 1
        %v1040 = vsel %vm545, %v1035, %v1039
        %v1041 = vshrl.u32 %v1011, 16
        %v1043 = vor.u32 %v1041, %v1039
        %v1045 = vshll.u32 %v1012, 16
        %v1047 = vrot.slane %v1045, 1
        %v1048 = vsel %vm545, %v1043, %v1047
        %v1050 = vsel %vm586, %v1024, 0
        %v1053 = vsel %vm586, %v1032, 0
        %v1056 = vsel %vm586, %v1040, 0
        %v1059 = vsel %vm586, %v1048, 0
        %v1062 = vsel %vm599, %v1003, 0
        %1064 = vmatprep.subr.bf16.mxu0 0
        %1065 = vmatpush1.bf16.msra.mxu0 %v1062
        %1066 = vmatprep.subr.bf16.mxu0 0
        %1067 = vmatpush1.bf16.msra.mxu0 0
        %1068 = vmatprep.subr.bf16.mxu0 0
        %1069 = vmatpush1.bf16.msra.mxu0 0
        %1070 = vmatprep.subr.bf16.mxu0 0
        %1071 = vmatpush1.bf16.msra.mxu0 0
        %1072 = vmatprep.subr.bf16.mxu0 0
        %1073 = vmatpush1.bf16.msra.mxu0 0
        %1074 = vmatprep.subr.bf16.mxu0 0
        %1075 = vmatpush1.bf16.msra.mxu0 0
        %1076 = vmatprep.subr.bf16.mxu0 0
        %1077 = vmatpush1.bf16.msra.mxu0 0
        %1078 = vmatprep.subr.bf16.mxu0 0
        %1079 = vmatpush1.bf16.msra.mxu0 0
        %1080 = vmatprep.subr.bf16.mxu0 0
        %1081 = vmatpush1.bf16.msra.mxu0 0
        %1082 = vmatprep.subr.bf16.mxu0 0
        %1083 = vmatpush1.bf16.msra.mxu0 0
        %1084 = vmatprep.subr.bf16.mxu0 0
        %1085 = vmatpush1.bf16.msra.mxu0 0
        %1086 = vmatprep.subr.bf16.mxu0 0
        %1087 = vmatpush1.bf16.msra.mxu0 0
        %1088 = vmatprep.subr.bf16.mxu0 0
        %1089 = vmatpush1.bf16.msra.mxu0 0
        %1090 = vmatprep.subr.bf16.mxu0 0
        %1091 = vmatpush1.bf16.msra.mxu0 0
        %1092 = vmatprep.subr.bf16.mxu0 0
        %1093 = vmatpush1.bf16.msra.mxu0 0
        %1094 = vmatprep.subr.bf16.mxu0 0
        %1095 = vmatpush1.bf16.msra.mxu0 0
        %1096 = vmatprep.mubr.bf16.mxu0 0
        %1097 = vmatmul.mubr.bf16.gmra.mrb[0].mxu0 %v1050
        %v1098 = vpop.f32.mrb[0].mxu0
        %v1099 = vadd.f32 0.0, %v1098
        %v1100 = vpop.f32.mrb[0].mxu0
        %v1101 = vpop.f32.mrb[0].mxu0
        %v1102 = vadd.f32 0.0, %v1101
        %v1103 = vpop.f32.mrb[0].mxu0
        %1104 = vmatprep.mubr.bf16.mxu0 0
        %1105 = vmatmul.mubr.bf16.gmra.mrb[0].mxu0 %v1053
        %v1106 = vpop.f32.mrb[0].mxu0
        %v1107 = vadd.f32 0.0, %v1106
        %v1108 = vpop.f32.mrb[0].mxu0
        %v1109 = vpop.f32.mrb[0].mxu0
        %v1110 = vadd.f32 0.0, %v1109
        %v1111 = vpop.f32.mrb[0].mxu0
        %1112 = vmatprep.mubr.bf16.mxu0 0
        %1113 = vmatmul.mubr.bf16.gmra.mrb[0].mxu0 %v1056
        %v1114 = vpop.f32.mrb[0].mxu0
        %v1115 = vadd.f32 0.0, %v1114
        %v1116 = vpop.f32.mrb[0].mxu0
        %v1117 = vpop.f32.mrb[0].mxu0
        %v1118 = vadd.f32 0.0, %v1117
        %v1119 = vpop.f32.mrb[0].mxu0
        %1120 = vmatprep.mubr.bf16.mxu0 0
        %1121 = vmatmul.mubr.bf16.gmra.mrb[0].mxu0 %v1059
        %v1122 = vpop.f32.mrb[0].mxu0
        %v1123 = vadd.f32 0.0, %v1122
        %v1124 = vpop.f32.mrb[0].mxu0
        %v1125 = vpop.f32.mrb[0].mxu0
        %v1126 = vadd.f32 0.0, %v1125
        %v1127 = vpop.f32.mrb[0].mxu0
        %1128 = vdwg.mxu0
        %v1129 = vadd.f32 %v995, %v1099
        %v1130 = vadd.f32 %v996, %v1102
        %v1131 = vadd.f32 %v997, %v1107
        %v1132 = vadd.f32 %v998, %v1110
        %v1133 = vadd.f32 %v999, %v1115
        %v1134 = vadd.f32 %v1000, %v1118
        %v1135 = vadd.f32 %v1001, %v1123
        %v1136 = vadd.f32 %v1002, %v1126
        %v1137 = vld [vmem:[%s1 + $0x8] sm:$0xc]
        %v1147 = vunpack.c.l.b16 %v491
        %v1148 = vunpack.c.l.b16 %v492
        %v1149 = vunpack.c.l.b16 %v493
        %v1150 = vunpack.c.l.b16 %v494
        %v1151 = vunpack.c.l.b16 %v495
        %v1152 = vunpack.c.l.b16 %v496
        %v1153 = vunpack.c.l.b16 %v497
        %v1154 = vunpack.c.l.b16 %v498
        %v1155 = vunpack.c.l.b16 %v499
        %v1156 = vpack.c.b16 %v1148, %v1147
        %v1157 = vpack.c.b16 %v1150, %v1149
        %v1158 = vpack.c.b16 %v1152, %v1151
        %v1159 = vpack.c.b16 %v1154, %v1153
        %v1160 = vpack.c.b16 %v1155, %v1155
        %v1161 = vrot.slane %v1156, 1
        %v1162 = vrot.slane %v1157, 1
        %v1163 = vsel %vm792, %v1161, %v1162
        %v1164 = vrot.slane %v1158, 1
        %v1165 = vsel %vm792, %v1162, %v1164
        %v1166 = vrot.slane %v1159, 1
        %v1167 = vsel %vm792, %v1164, %v1166
        %v1168 = vrot.slane %v1160, 1
        %v1169 = vsel %vm792, %v1166, %v1168
        %v1171 = vunpack.c.l.b16 %v1137
        %v1172 = vpack.c.b16 %v1171, %v1171
        %v1173 = vrot.slane %v1172, 2
        %v1175 = vsel %vm586, %v1163, 0
        %v1178 = vsel %vm586, %v1165, 0
        %v1181 = vsel %vm586, %v1167, 0
        %v1184 = vsel %vm586, %v1169, 0
        %v1187 = vsel %vm599, %v1173, 0
        %1189 = vmatprep.subr.bf16.mxu0 0
        %1190 = vmatpush1.bf16.msra.mxu0 %v1187
        %1191 = vmatprep.subr.bf16.mxu0 0
        %1192 = vmatpush1.bf16.msra.mxu0 0
        %1193 = vmatprep.subr.bf16.mxu0 0
        %1194 = vmatpush1.bf16.msra.mxu0 0
        %1195 = vmatprep.subr.bf16.mxu0 0
        %1196 = vmatpush1.bf16.msra.mxu0 0
        %1197 = vmatprep.subr.bf16.mxu0 0
        %1198 = vmatpush1.bf16.msra.mxu0 0
        %1199 = vmatprep.subr.bf16.mxu0 0
        %1200 = vmatpush1.bf16.msra.mxu0 0
        %1201 = vmatprep.subr.bf16.mxu0 0
        %1202 = vmatpush1.bf16.msra.mxu0 0
        %1203 = vmatprep.subr.bf16.mxu0 0
        %1204 = vmatpush1.bf16.msra.mxu0 0
        %1205 = vmatprep.subr.bf16.mxu0 0
        %1206 = vmatpush1.bf16.msra.mxu0 0
        %1207 = vmatprep.subr.bf16.mxu0 0
        %1208 = vmatpush1.bf16.msra.mxu0 0
        %1209 = vmatprep.subr.bf16.mxu0 0
        %1210 = vmatpush1.bf16.msra.mxu0 0
        %1211 = vmatprep.subr.bf16.mxu0 0
        %1212 = vmatpush1.bf16.msra.mxu0 0
        %1213 = vmatprep.subr.bf16.mxu0 0
        %1214 = vmatpush1.bf16.msra.mxu0 0
        %1215 = vmatprep.subr.bf16.mxu0 0
        %1216 = vmatpush1.bf16.msra.mxu0 0
        %1217 = vmatprep.subr.bf16.mxu0 0
        %1218 = vmatpush1.bf16.msra.mxu0 0
        %1219 = vmatprep.subr.bf16.mxu0 0
        %1220 = vmatpush1.bf16.msra.mxu0 0
        %1221 = vmatprep.mubr.bf16.mxu0 0
        %1222 = vmatmul.mubr.bf16.gmra.mrb[0].mxu0 %v1175
        %v1223 = vpop.f32.mrb[0].mxu0
        %v1224 = vadd.f32 0.0, %v1223
        %v1225 = vpop.f32.mrb[0].mxu0
        %v1226 = vpop.f32.mrb[0].mxu0
        %v1227 = vadd.f32 0.0, %v1226
        %v1228 = vpop.f32.mrb[0].mxu0
        %1229 = vmatprep.mubr.bf16.mxu0 0
        %1230 = vmatmul.mubr.bf16.gmra.mrb[0].mxu0 %v1178
        %v1231 = vpop.f32.mrb[0].mxu0
        %v1232 = vadd.f32 0.0, %v1231
        %v1233 = vpop.f32.mrb[0].mxu0
        %v1234 = vpop.f32.mrb[0].mxu0
        %v1235 = vadd.f32 0.0, %v1234
        %v1236 = vpop.f32.mrb[0].mxu0
        %1237 = vmatprep.mubr.bf16.mxu0 0
        %1238 = vmatmul.mubr.bf16.gmra.mrb[0].mxu0 %v1181
        %v1239 = vpop.f32.mrb[0].mxu0
        %v1240 = vadd.f32 0.0, %v1239
        %v1241 = vpop.f32.mrb[0].mxu0
        %v1242 = vpop.f32.mrb[0].mxu0
        %v1243 = vadd.f32 0.0, %v1242
        %v1244 = vpop.f32.mrb[0].mxu0
        %1245 = vmatprep.mubr.bf16.mxu0 0
        %1246 = vmatmul.mubr.bf16.gmra.mrb[0].mxu0 %v1184
        %v1247 = vpop.f32.mrb[0].mxu0
        %v1248 = vadd.f32 0.0, %v1247
        %v1249 = vpop.f32.mrb[0].mxu0
        %v1250 = vpop.f32.mrb[0].mxu0
        %v1251 = vadd.f32 0.0, %v1250
        %v1252 = vpop.f32.mrb[0].mxu0
        %1253 = vdwg.mxu0
        %v1254 = vadd.f32 %v1129, %v1224
        %v1255 = vadd.f32 %v1130, %v1227
        %v1256 = vadd.f32 %v1131, %v1232
        %v1257 = vadd.f32 %v1132, %v1235
        %v1258 = vadd.f32 %v1133, %v1240
        %v1259 = vadd.f32 %v1134, %v1243
        %v1260 = vadd.f32 %v1135, %v1248
        %v1261 = vadd.f32 %v1136, %v1251
        %v1262 = vld [vmem:[%s1 + $0xc] sm:$0x3]
        %v1271 = vunpack.c.l.b16 %v501
        %v1272 = vunpack.c.l.b16 %v502
        %v1273 = vunpack.c.l.b16 %v503
        %v1274 = vunpack.c.l.b16 %v504
        %v1275 = vunpack.c.l.b16 %v505
        %v1276 = vunpack.c.l.b16 %v506
        %v1277 = vunpack.c.l.b16 %v507
        %v1278 = vunpack.c.l.b16 %v508
        %v1279 = vpack.c.b16 %v1272, %v1271
        %v1280 = vpack.c.b16 %v1274, %v1273
        %v1281 = vpack.c.b16 %v1276, %v1275
        %v1282 = vpack.c.b16 %v1278, %v1277
        %v1284 = vsel %vm586, %v1279, 0
        %v1287 = vsel %vm586, %v1280, 0
        %v1290 = vsel %vm586, %v1281, 0
        %v1293 = vsel %vm586, %v1282, 0
        %v1296 = vsel %vm599, %v1262, 0
        %1298 = vmatprep.subr.bf16.mxu0 0
        %1299 = vmatpush1.bf16.msra.mxu0 %v1296
        %1300 = vmatprep.subr.bf16.mxu0 0
        %1301 = vmatpush1.bf16.msra.mxu0 0
        %1302 = vmatprep.subr.bf16.mxu0 0
        %1303 = vmatpush1.bf16.msra.mxu0 0
        %1304 = vmatprep.subr.bf16.mxu0 0
        %1305 = vmatpush1.bf16.msra.mxu0 0
        %1306 = vmatprep.subr.bf16.mxu0 0
        %1307 = vmatpush1.bf16.msra.mxu0 0
        %1308 = vmatprep.subr.bf16.mxu0 0
        %1309 = vmatpush1.bf16.msra.mxu0 0
        %1310 = vmatprep.subr.bf16.mxu0 0
        %1311 = vmatpush1.bf16.msra.mxu0 0
        %1312 = vmatprep.subr.bf16.mxu0 0
        %1313 = vmatpush1.bf16.msra.mxu0 0
        %1314 = vmatprep.subr.bf16.mxu0 0
        %1315 = vmatpush1.bf16.msra.mxu0 0
        %1316 = vmatprep.subr.bf16.mxu0 0
        %1317 = vmatpush1.bf16.msra.mxu0 0
        %1318 = vmatprep.subr.bf16.mxu0 0
        %1319 = vmatpush1.bf16.msra.mxu0 0
        %1320 = vmatprep.subr.bf16.mxu0 0
        %1321 = vmatpush1.bf16.msra.mxu0 0
        %1322 = vmatprep.subr.bf16.mxu0 0
        %1323 = vmatpush1.bf16.msra.mxu0 0
        %1324 = vmatprep.subr.bf16.mxu0 0
        %1325 = vmatpush1.bf16.msra.mxu0 0
        %1326 = vmatprep.subr.bf16.mxu0 0
        %1327 = vmatpush1.bf16.msra.mxu0 0
        %1328 = vmatprep.subr.bf16.mxu0 0
        %1329 = vmatpush1.bf16.msra.mxu0 0
        %1330 = vmatprep.mubr.bf16.mxu0 0
        %1331 = vmatmul.mubr.bf16.gmra.mrb[0].mxu0 %v1284
        %v1332 = vpop.f32.mrb[0].mxu0
        %v1333 = vadd.f32 0.0, %v1332
        %v1334 = vpop.f32.mrb[0].mxu0
        %v1335 = vpop.f32.mrb[0].mxu0
        %v1336 = vadd.f32 0.0, %v1335
        %v1337 = vpop.f32.mrb[0].mxu0
        %1338 = vmatprep.mubr.bf16.mxu0 0
        %1339 = vmatmul.mubr.bf16.gmra.mrb[0].mxu0 %v1287
        %v1340 = vpop.f32.mrb[0].mxu0
        %v1341 = vadd.f32 0.0, %v1340
        %v1342 = vpop.f32.mrb[0].mxu0
        %v1343 = vpop.f32.mrb[0].mxu0
        %v1344 = vadd.f32 0.0, %v1343
        %v1345 = vpop.f32.mrb[0].mxu0
        %1346 = vmatprep.mubr.bf16.mxu0 0
        %1347 = vmatmul.mubr.bf16.gmra.mrb[0].mxu0 %v1290
        %v1348 = vpop.f32.mrb[0].mxu0
        %v1349 = vadd.f32 0.0, %v1348
        %v1350 = vpop.f32.mrb[0].mxu0
        %v1351 = vpop.f32.mrb[0].mxu0
        %v1352 = vadd.f32 0.0, %v1351
        %v1353 = vpop.f32.mrb[0].mxu0
        %1354 = vmatprep.mubr.bf16.mxu0 0
        %1355 = vmatmul.mubr.bf16.gmra.mrb[0].mxu0 %v1293
        %v1356 = vpop.f32.mrb[0].mxu0
        %v1357 = vadd.f32 0.0, %v1356
        %v1358 = vpop.f32.mrb[0].mxu0
        %v1359 = vpop.f32.mrb[0].mxu0
        %v1360 = vadd.f32 0.0, %v1359
        %v1361 = vpop.f32.mrb[0].mxu0
        %1362 = vdwg.mxu0
        %v1363 = vadd.f32 %v1254, %v1333
        %v1364 = vadd.f32 %v1255, %v1336
        %v1365 = vadd.f32 %v1256, %v1341
        %v1366 = vadd.f32 %v1257, %v1344
        %v1367 = vadd.f32 %v1258, %v1349
        %v1368 = vadd.f32 %v1259, %v1352
        %v1369 = vadd.f32 %v1260, %v1357
        %v1370 = vadd.f32 %v1261, %v1360
        %v1371 = vld [vmem:[%s1 + $0xc] sm:$0xc]
        %v1374 = vunpack.c.l.b16 %v500
        %v1375 = vunpack.c.l.b16 %v509
        %v1376 = vpack.c.b16 %v1374, %v1006
        %v1377 = vpack.c.b16 %v1375, %v1375
        %v1379 = vshll.u32 %v1376, 16
        %v1381 = vrot.slane %v1379, 1
        %v1382 = vsel %vm545, %v576, %v1381
        %v1383 = vshrl.u32 %v1376, 16
        %v1385 = vor.u32 %v1383, %v1381
        %v1387 = vshll.u32 %v1377, 16
        %v1389 = vrot.slane %v1387, 1
        %v1390 = vsel %vm545, %v1385, %v1389
        %v1392 = vunpack.c.l.b16 %v1371
        %v1393 = vpack.c.b16 %v1392, %v1392
        %v1394 = vrot.slane %v1393, 2
        %v1396 = vsel %vm586, %v1382, 0
        %v1399 = vsel %vm586, %v1390, 0
        %v1402 = vsel %vm599, %v1394, 0
        %1404 = vmatprep.subr.bf16.mxu0 0
        %1405 = vmatpush1.bf16.msra.mxu0 %v1402
        %1406 = vmatprep.subr.bf16.mxu0 0
        %1407 = vmatpush1.bf16.msra.mxu0 0
        %1408 = vmatprep.subr.bf16.mxu0 0
        %1409 = vmatpush1.bf16.msra.mxu0 0
        %1410 = vmatprep.subr.bf16.mxu0 0
        %1411 = vmatpush1.bf16.msra.mxu0 0
        %1412 = vmatprep.subr.bf16.mxu0 0
        %1413 = vmatpush1.bf16.msra.mxu0 0
        %1414 = vmatprep.subr.bf16.mxu0 0
        %1415 = vmatpush1.bf16.msra.mxu0 0
        %1416 = vmatprep.subr.bf16.mxu0 0
        %1417 = vmatpush1.bf16.msra.mxu0 0
        %1418 = vmatprep.subr.bf16.mxu0 0
        %1419 = vmatpush1.bf16.msra.mxu0 0
        %1420 = vmatprep.subr.bf16.mxu0 0
        %1421 = vmatpush1.bf16.msra.mxu0 0
        %1422 = vmatprep.subr.bf16.mxu0 0
        %1423 = vmatpush1.bf16.msra.mxu0 0
        %1424 = vmatprep.subr.bf16.mxu0 0
        %1425 = vmatpush1.bf16.msra.mxu0 0
        %1426 = vmatprep.subr.bf16.mxu0 0
        %1427 = vmatpush1.bf16.msra.mxu0 0
        %1428 = vmatprep.subr.bf16.mxu0 0
        %1429 = vmatpush1.bf16.msra.mxu0 0
        %1430 = vmatprep.subr.bf16.mxu0 0
        %1431 = vmatpush1.bf16.msra.mxu0 0
        %1432 = vmatprep.subr.bf16.mxu0 0
        %1433 = vmatpush1.bf16.msra.mxu0 0
        %1434 = vmatprep.subr.bf16.mxu0 0
        %1435 = vmatpush1.bf16.msra.mxu0 0
        %1436 = vmatprep.mubr.bf16.mxu0 0
        %1437 = vmatmul.mubr.bf16.gmra.mrb[0].mxu0 %v591
        %v1438 = vpop.f32.mrb[0].mxu0
        %v1439 = vadd.f32 0.0, %v1438
        %v1440 = vpop.f32.mrb[0].mxu0
        %v1441 = vpop.f32.mrb[0].mxu0
        %v1442 = vadd.f32 0.0, %v1441
        %v1443 = vpop.f32.mrb[0].mxu0
        %1444 = vmatprep.mubr.bf16.mxu0 0
        %1445 = vmatmul.mubr.bf16.gmra.mrb[0].mxu0 %v594
        %v1446 = vpop.f32.mrb[0].mxu0
        %v1447 = vadd.f32 0.0, %v1446
        %v1448 = vpop.f32.mrb[0].mxu0
        %v1449 = vpop.f32.mrb[0].mxu0
        %v1450 = vadd.f32 0.0, %v1449
        %v1451 = vpop.f32.mrb[0].mxu0
        %1452 = vmatprep.mubr.bf16.mxu0 0
        %1453 = vmatmul.mubr.bf16.gmra.mrb[0].mxu0 %v1396
        %v1454 = vpop.f32.mrb[0].mxu0
        %v1455 = vadd.f32 0.0, %v1454
        %v1456 = vpop.f32.mrb[0].mxu0
        %v1457 = vpop.f32.mrb[0].mxu0
        %v1458 = vadd.f32 0.0, %v1457
        %v1459 = vpop.f32.mrb[0].mxu0
        %1460 = vmatprep.mubr.bf16.mxu0 0
        %1461 = vmatmul.mubr.bf16.gmra.mrb[0].mxu0 %v1399
        %v1462 = vpop.f32.mrb[0].mxu0
        %v1463 = vadd.f32 0.0, %v1462
        %v1464 = vpop.f32.mrb[0].mxu0
        %v1465 = vpop.f32.mrb[0].mxu0
        %v1466 = vadd.f32 0.0, %v1465
        %v1467 = vpop.f32.mrb[0].mxu0
        %1468 = vdwg.mxu0
        %v1469 = vadd.f32 %v1363, %v1439
        %v1470 = vadd.f32 %v1364, %v1442
        %v1471 = vadd.f32 %v1365, %v1447
        %v1472 = vadd.f32 %v1366, %v1450
        %v1473 = vadd.f32 %v1367, %v1455
        %v1474 = vadd.f32 %v1368, %v1458
        %v1475 = vadd.f32 %v1369, %v1463
        %v1476 = vadd.f32 %v1370, %v1466
        %v1477 = vld [vmem:[%s1 + $0x10] sm:$0x3]
        %v1487 = vunpack.c.l.b16 %v511
        %v1488 = vunpack.c.l.b16 %v512
        %v1489 = vunpack.c.l.b16 %v513
        %v1490 = vunpack.c.l.b16 %v514
        %v1491 = vunpack.c.l.b16 %v515
        %v1492 = vunpack.c.l.b16 %v516
        %v1493 = vunpack.c.l.b16 %v517
        %v1494 = vunpack.c.l.b16 %v518
        %v1495 = vunpack.c.l.b16 %v519
        %v1496 = vpack.c.b16 %v1488, %v1487
        %v1497 = vpack.c.b16 %v1490, %v1489
        %v1498 = vpack.c.b16 %v1492, %v1491
        %v1499 = vpack.c.b16 %v1494, %v1493
        %v1500 = vpack.c.b16 %v1495, %v1495
        %v1501 = vrot.slane %v1496, 1
        %v1502 = vrot.slane %v1497, 1
        %v1503 = vsel %vm792, %v1501, %v1502
        %v1504 = vrot.slane %v1498, 1
        %v1505 = vsel %vm792, %v1502, %v1504
        %v1506 = vrot.slane %v1499, 1
        %v1507 = vsel %vm792, %v1504, %v1506
        %v1508 = vrot.slane %v1500, 1
        %v1509 = vsel %vm792, %v1506, %v1508
        %v1511 = vsel %vm586, %v1503, 0
        %v1514 = vsel %vm586, %v1505, 0
        %v1517 = vsel %vm586, %v1507, 0
        %v1520 = vsel %vm586, %v1509, 0
        %v1523 = vsel %vm599, %v1477, 0
        %1525 = vmatprep.subr.bf16.mxu0 0
        %1526 = vmatpush1.bf16.msra.mxu0 %v1523
        %1527 = vmatprep.subr.bf16.mxu0 0
        %1528 = vmatpush1.bf16.msra.mxu0 0
        %1529 = vmatprep.subr.bf16.mxu0 0
        %1530 = vmatpush1.bf16.msra.mxu0 0
        %1531 = vmatprep.subr.bf16.mxu0 0
        %1532 = vmatpush1.bf16.msra.mxu0 0
        %1533 = vmatprep.subr.bf16.mxu0 0
        %1534 = vmatpush1.bf16.msra.mxu0 0
        %1535 = vmatprep.subr.bf16.mxu0 0
        %1536 = vmatpush1.bf16.msra.mxu0 0
        %1537 = vmatprep.subr.bf16.mxu0 0
        %1538 = vmatpush1.bf16.msra.mxu0 0
        %1539 = vmatprep.subr.bf16.mxu0 0
        %1540 = vmatpush1.bf16.msra.mxu0 0
        %1541 = vmatprep.subr.bf16.mxu0 0
        %1542 = vmatpush1.bf16.msra.mxu0 0
        %1543 = vmatprep.subr.bf16.mxu0 0
        %1544 = vmatpush1.bf16.msra.mxu0 0
        %1545 = vmatprep.subr.bf16.mxu0 0
        %1546 = vmatpush1.bf16.msra.mxu0 0
        %1547 = vmatprep.subr.bf16.mxu0 0
        %1548 = vmatpush1.bf16.msra.mxu0 0
        %1549 = vmatprep.subr.bf16.mxu0 0
        %1550 = vmatpush1.bf16.msra.mxu0 0
        %1551 = vmatprep.subr.bf16.mxu0 0
        %1552 = vmatpush1.bf16.msra.mxu0 0
        %1553 = vmatprep.subr.bf16.mxu0 0
        %1554 = vmatpush1.bf16.msra.mxu0 0
        %1555 = vmatprep.subr.bf16.mxu0 0
        %1556 = vmatpush1.bf16.msra.mxu0 0
        %1557 = vmatprep.mubr.bf16.mxu0 0
        %1558 = vmatmul.mubr.bf16.gmra.mrb[0].mxu0 %v1511
        %v1559 = vpop.f32.mrb[0].mxu0
        %v1560 = vadd.f32 0.0, %v1559
        %v1561 = vpop.f32.mrb[0].mxu0
        %v1562 = vpop.f32.mrb[0].mxu0
        %v1563 = vadd.f32 0.0, %v1562
        %v1564 = vpop.f32.mrb[0].mxu0
        %1565 = vmatprep.mubr.bf16.mxu0 0
        %1566 = vmatmul.mubr.bf16.gmra.mrb[0].mxu0 %v1514
        %v1567 = vpop.f32.mrb[0].mxu0
        %v1568 = vadd.f32 0.0, %v1567
        %v1569 = vpop.f32.mrb[0].mxu0
        %v1570 = vpop.f32.mrb[0].mxu0
        %v1571 = vadd.f32 0.0, %v1570
        %v1572 = vpop.f32.mrb[0].mxu0
        %1573 = vmatprep.mubr.bf16.mxu0 0
        %1574 = vmatmul.mubr.bf16.gmra.mrb[0].mxu0 %v1517
        %v1575 = vpop.f32.mrb[0].mxu0
        %v1576 = vadd.f32 0.0, %v1575
        %v1577 = vpop.f32.mrb[0].mxu0
        %v1578 = vpop.f32.mrb[0].mxu0
        %v1579 = vadd.f32 0.0, %v1578
        %v1580 = vpop.f32.mrb[0].mxu0
        %1581 = vmatprep.mubr.bf16.mxu0 0
        %1582 = vmatmul.mubr.bf16.gmra.mrb[0].mxu0 %v1520
        %v1583 = vpop.f32.mrb[0].mxu0
        %v1584 = vadd.f32 0.0, %v1583
        %v1585 = vpop.f32.mrb[0].mxu0
        %v1586 = vpop.f32.mrb[0].mxu0
        %v1587 = vadd.f32 0.0, %v1586
        %v1588 = vpop.f32.mrb[0].mxu0
        %1589 = vdwg.mxu0
        %v1590 = vadd.f32 %v1469, %v1560
        %v1591 = vadd.f32 %v1470, %v1563
        %v1592 = vadd.f32 %v1471, %v1568
        %v1593 = vadd.f32 %v1472, %v1571
        %v1594 = vadd.f32 %v1473, %v1576
        %v1595 = vadd.f32 %v1474, %v1579
        %v1596 = vadd.f32 %v1475, %v1584
        %v1597 = vadd.f32 %v1476, %v1587
        %v1598 = vadd.f32 %v1590, %v1591
        %v1599 = vadd.f32 %v1598, %v1592
        %v1600 = vadd.f32 %v1599, %v1593
        %v1601 = vadd.f32 %v1600, %v1594
        %v1602 = vadd.f32 %v1601, %v1595
        %v1603 = vadd.f32 %v1602, %v1596
        %v1604 = vadd.f32 %v1603, %v1597
        %v1605 = vrot.slane %v1604, 4
        %v1606 = vadd.f32 %v1604, %v1605
        %v1607 = vrot.slane %v1606, 2
        %v1608 = vadd.f32 %v1606, %v1607
        %v1609 = vrot.slane %v1608, 1
        %v1610 = vadd.f32 %v1608, %v1609
        %v1611 = vadd.f32 %v1610, 0.0
        %v1612 = vmul.f32 %v1590, %v1590
        %v1613 = vmul.f32 %v1591, %v1591
        %v1614 = vmul.f32 %v1592, %v1592
        %v1615 = vmul.f32 %v1593, %v1593
        %v1616 = vmul.f32 %v1594, %v1594
        %v1617 = vmul.f32 %v1595, %v1595
        %v1618 = vmul.f32 %v1596, %v1596
        %v1619 = vmul.f32 %v1597, %v1597
        %v1620 = vadd.f32 %v1612, %v1613
        %v1621 = vadd.f32 %v1620, %v1614
        %v1622 = vadd.f32 %v1621, %v1615
        %v1623 = vadd.f32 %v1622, %v1616
        %v1624 = vadd.f32 %v1623, %v1617
        %v1625 = vadd.f32 %v1624, %v1618
        %v1626 = vadd.f32 %v1625, %v1619
        %v1627 = vrot.slane %v1626, 4
        %v1628 = vadd.f32 %v1626, %v1627
        %v1629 = vrot.slane %v1628, 2
        %v1630 = vadd.f32 %v1628, %v1629
        %v1631 = vrot.slane %v1630, 1
        %v1632 = vadd.f32 %v1630, %v1631
        %v1633 = vadd.f32 %v1632, 0.0
        %1634 = vst [vmem:[#allocation2] sm:$0xff] %v1590
        %1635 = vst [vmem:[#allocation2 + $0x8] sm:$0xff] %v1591
        %1636 = vst [vmem:[#allocation2 + $0x10] sm:$0xff] %v1592
        %1637 = vst [vmem:[#allocation2 + $0x18] sm:$0xff] %v1593
        %1638 = vst [vmem:[#allocation2 + $0x20] sm:$0xff] %v1594
        %1639 = vst [vmem:[#allocation2 + $0x28] sm:$0xff] %v1595
        %1640 = vst [vmem:[#allocation2 + $0x30] sm:$0xff] %v1596
        %1641 = vst [vmem:[#allocation2 + $0x38] sm:$0xff] %v1597
        %v1642 = vld [vmem:[#allocation3] sm:$0xff]
        %v1643 = vld [vmem:[#allocation3 + $0x8] sm:$0xff]
        %v1644 = vld [vmem:[#allocation3 + $0x10] sm:$0xff]
        %v1645 = vld [vmem:[#allocation3 + $0x18] sm:$0xff]
        %v1646 = vld [vmem:[#allocation3 + $0x20] sm:$0xff]
        %v1647 = vld [vmem:[#allocation3 + $0x28] sm:$0xff]
        %v1648 = vld [vmem:[#allocation3 + $0x30] sm:$0xff]
        %v1649 = vld [vmem:[#allocation3 + $0x38] sm:$0xff]
        %v1650 = vld [vmem:[#allocation3 + $0x40] sm:$0xff]
        %v1651 = vld [vmem:[#allocation3 + $0x48] sm:$0xff]
        %v1652 = vld [vmem:[#allocation3 + $0x50] sm:$0xff]
        %v1653 = vld [vmem:[#allocation3 + $0x58] sm:$0xff]
        %v1654 = vld [vmem:[#allocation3 + $0x60] sm:$0xff]
        %v1655 = vld [vmem:[#allocation3 + $0x68] sm:$0xff]
        %v1656 = vld [vmem:[#allocation3 + $0x70] sm:$0xff]
        %v1657 = vld [vmem:[#allocation3 + $0x78] sm:$0xff]
        %1658 = vmatprep.subr.mxu0 0.0
        %1659 = vmatpush1.msra.mxu0 %v1642
        %1660 = vmatprep.subr.mxu0 0.0
        %1661 = vmatpush1.msra.mxu0 %v1643
        %1662 = vmatprep.subr.mxu0 0.0
        %1663 = vmatpush1.msra.mxu0 %v1644
        %1664 = vmatprep.subr.mxu0 0.0
        %1665 = vmatpush1.msra.mxu0 %v1645
        %1666 = vmatprep.subr.mxu0 0.0
        %1667 = vmatpush1.msra.mxu0 %v1646
        %1668 = vmatprep.subr.mxu0 0.0
        %1669 = vmatpush1.msra.mxu0 %v1647
        %1670 = vmatprep.subr.mxu0 0.0
        %1671 = vmatpush1.msra.mxu0 %v1648
        %1672 = vmatprep.subr.mxu0 0.0
        %1673 = vmatpush1.msra.mxu0 %v1649
        %1674 = vmatprep.subr.mxu0 0.0
        %1675 = vmatpush1.msra.mxu0 %v1650
        %1676 = vmatprep.subr.mxu0 0.0
        %1677 = vmatpush1.msra.mxu0 %v1651
        %1678 = vmatprep.subr.mxu0 0.0
        %1679 = vmatpush1.msra.mxu0 %v1652
        %1680 = vmatprep.subr.mxu0 0.0
        %1681 = vmatpush1.msra.mxu0 %v1653
        %1682 = vmatprep.subr.mxu0 0.0
        %1683 = vmatpush1.msra.mxu0 %v1654
        %1684 = vmatprep.subr.mxu0 0.0
        %1685 = vmatpush1.msra.mxu0 %v1655
        %1686 = vmatprep.subr.mxu0 0.0
        %1687 = vmatpush1.msra.mxu0 %v1656
        %1688 = vmatprep.subr.mxu0 0.0
        %1689 = vmatpush1.msra.mxu0 %v1657
        %1690 = vmatprep.subr.mxu0 0.0
        %1691 = vmatpush1.msra.mxu0 0.0
        %1692 = vmatprep.subr.mxu0 0.0
        %1693 = vmatpush1.msra.mxu0 0.0
        %1694 = vmatprep.subr.mxu0 0.0
        %1695 = vmatpush1.msra.mxu0 0.0
        %1696 = vmatprep.subr.mxu0 0.0
        %1697 = vmatpush1.msra.mxu0 0.0
        %1698 = vmatprep.subr.mxu0 0.0
        %1699 = vmatpush1.msra.mxu0 0.0
        %1700 = vmatprep.subr.mxu0 0.0
        %1701 = vmatpush1.msra.mxu0 0.0
        %1702 = vmatprep.subr.mxu0 0.0
        %1703 = vmatpush1.msra.mxu0 0.0
        %1704 = vmatprep.subr.mxu0 0.0
        %1705 = vmatpush1.msra.mxu0 0.0
        %1706 = vmatprep.subr.mxu0 0.0
        %1707 = vmatpush1.msra.mxu0 0.0
        %1708 = vmatprep.subr.mxu0 0.0
        %1709 = vmatpush1.msra.mxu0 0.0
        %1710 = vmatprep.subr.mxu0 0.0
        %1711 = vmatpush1.msra.mxu0 0.0
        %1712 = vmatprep.subr.mxu0 0.0
        %1713 = vmatpush1.msra.mxu0 0.0
        %1714 = vmatprep.subr.mxu0 0.0
        %1715 = vmatpush1.msra.mxu0 0.0
        %1716 = vmatprep.subr.mxu0 0.0
        %1717 = vmatpush1.msra.mxu0 0.0
        %1718 = vmatprep.subr.mxu0 0.0
        %1719 = vmatpush1.msra.mxu0 0.0
        %1720 = vmatprep.subr.mxu0 0.0
        %1721 = vmatpush1.msra.mxu0 0.0
        %1722 = vmatprep.mubr.f32.mxu0 0.0
        %1723 = vmatmul.mubr.f32.gmra.mrb[0].mxu0 %v1611
        %v1724 = vpop.f32.mrb[0].mxu0
        %v1725 = vadd.f32 0.0, %v1724
        %v1726 = vpop.f32.mrb[0].mxu0
        %1727 = vdwg.mxu0
        %1728 = vmatprep.subr.mxu0 0.0
        %1729 = vmatpush1.msra.mxu0 %v1642
        %1730 = vmatprep.subr.mxu0 0.0
        %1731 = vmatpush1.msra.mxu0 %v1643
        %1732 = vmatprep.subr.mxu0 0.0
        %1733 = vmatpush1.msra.mxu0 %v1644
        %1734 = vmatprep.subr.mxu0 0.0
        %1735 = vmatpush1.msra.mxu0 %v1645
        %1736 = vmatprep.subr.mxu0 0.0
        %1737 = vmatpush1.msra.mxu0 %v1646
        %1738 = vmatprep.subr.mxu0 0.0
        %1739 = vmatpush1.msra.mxu0 %v1647
        %1740 = vmatprep.subr.mxu0 0.0
        %1741 = vmatpush1.msra.mxu0 %v1648
        %1742 = vmatprep.subr.mxu0 0.0
        %1743 = vmatpush1.msra.mxu0 %v1649
        %1744 = vmatprep.subr.mxu0 0.0
        %1745 = vmatpush1.msra.mxu0 %v1650
        %1746 = vmatprep.subr.mxu0 0.0
        %1747 = vmatpush1.msra.mxu0 %v1651
        %1748 = vmatprep.subr.mxu0 0.0
        %1749 = vmatpush1.msra.mxu0 %v1652
        %1750 = vmatprep.subr.mxu0 0.0
        %1751 = vmatpush1.msra.mxu0 %v1653
        %1752 = vmatprep.subr.mxu0 0.0
        %1753 = vmatpush1.msra.mxu0 %v1654
        %1754 = vmatprep.subr.mxu0 0.0
        %1755 = vmatpush1.msra.mxu0 %v1655
        %1756 = vmatprep.subr.mxu0 0.0
        %1757 = vmatpush1.msra.mxu0 %v1656
        %1758 = vmatprep.subr.mxu0 0.0
        %1759 = vmatpush1.msra.mxu0 %v1657
        %1760 = vmatprep.subr.mxu0 0.0
        %1761 = vmatpush1.msra.mxu0 0.0
        %1762 = vmatprep.subr.mxu0 0.0
        %1763 = vmatpush1.msra.mxu0 0.0
        %1764 = vmatprep.subr.mxu0 0.0
        %1765 = vmatpush1.msra.mxu0 0.0
        %1766 = vmatprep.subr.mxu0 0.0
        %1767 = vmatpush1.msra.mxu0 0.0
        %1768 = vmatprep.subr.mxu0 0.0
        %1769 = vmatpush1.msra.mxu0 0.0
        %1770 = vmatprep.subr.mxu0 0.0
        %1771 = vmatpush1.msra.mxu0 0.0
        %1772 = vmatprep.subr.mxu0 0.0
        %1773 = vmatpush1.msra.mxu0 0.0
        %1774 = vmatprep.subr.mxu0 0.0
        %1775 = vmatpush1.msra.mxu0 0.0
        %1776 = vmatprep.subr.mxu0 0.0
        %1777 = vmatpush1.msra.mxu0 0.0
        %1778 = vmatprep.subr.mxu0 0.0
        %1779 = vmatpush1.msra.mxu0 0.0
        %1780 = vmatprep.subr.mxu0 0.0
        %1781 = vmatpush1.msra.mxu0 0.0
        %1782 = vmatprep.subr.mxu0 0.0
        %1783 = vmatpush1.msra.mxu0 0.0
        %1784 = vmatprep.subr.mxu0 0.0
        %1785 = vmatpush1.msra.mxu0 0.0
        %1786 = vmatprep.subr.mxu0 0.0
        %1787 = vmatpush1.msra.mxu0 0.0
        %1788 = vmatprep.subr.mxu0 0.0
        %1789 = vmatpush1.msra.mxu0 0.0
        %1790 = vmatprep.subr.mxu0 0.0
        %1791 = vmatpush1.msra.mxu0 0.0
        %1792 = vmatprep.mubr.f32.mxu0 0.0
        %1793 = vmatmul.mubr.f32.gmra.mrb[0].mxu0 %v1633
        %v1794 = vpop.f32.mrb[0].mxu0
        %v1795 = vadd.f32 0.0, %v1794
        %v1796 = vpop.f32.mrb[0].mxu0
        %1797 = vdwg.mxu0
        %v1798 = vmul.f32 %v1725, %v1725
        %v1799 = vsub.f32 %v1795, %v1798
        %v1800 = vmax.f32 %v1799, 0.0
        %v1801 = vadd.f32 %v1800, 1e-05
        %v1802 = vrsqrt.pop %v1801
        %v1803 = vld [vmem:[%s3] sm:$0x1]
        %v1804 = vmul.f32 %v1803, %v1802
        %v1805 = vld [vmem:[%s4] sm:$0x1]
        %v1806 = vmul.f32 %v1725, %v1804
        %v1807 = vsub.f32 %v1805, %v1806
        %v1808 = vld [vmem:[#allocation2] sm:$0xff]
        %v1809 = vld [vmem:[#allocation2 + $0x8] sm:$0xff]
        %v1810 = vld [vmem:[#allocation2 + $0x10] sm:$0xff]
        %v1811 = vld [vmem:[#allocation2 + $0x18] sm:$0xff]
        %v1812 = vld [vmem:[#allocation2 + $0x20] sm:$0xff]
        %v1813 = vld [vmem:[#allocation2 + $0x28] sm:$0xff]
        %v1814 = vld [vmem:[#allocation2 + $0x30] sm:$0xff]
        %v1815 = vld [vmem:[#allocation2 + $0x38] sm:$0xff]
        %v1817 = vlaneseq
        %v1818 = vshrl.u32 %v1817, 7
        %v1819 = vsub.s32 0, %v1818
        %v1820 = vrot.slane %v1804, %v1819
        %v1822 = vmul.f32 %v1808, %v1820
        %v1823 = vmul.f32 %v1809, %v1820
        %v1824 = vmul.f32 %v1810, %v1820
        %v1825 = vmul.f32 %v1811, %v1820
        %v1826 = vmul.f32 %v1812, %v1820
        %v1827 = vmul.f32 %v1813, %v1820
        %v1828 = vmul.f32 %v1814, %v1820
        %v1829 = vmul.f32 %v1815, %v1820
        %v1831 = vlaneseq
        %v1832 = vshrl.u32 %v1831, 7
        %v1833 = vsub.s32 0, %v1832
        %v1834 = vrot.slane %v1807, %v1833
        %v1836 = vadd.f32 %v1822, %v1834
        %v1837 = vadd.f32 %v1823, %v1834
        %v1838 = vadd.f32 %v1824, %v1834
        %v1839 = vadd.f32 %v1825, %v1834
        %v1840 = vadd.f32 %v1826, %v1834
        %v1841 = vadd.f32 %v1827, %v1834
        %v1842 = vadd.f32 %v1828, %v1834
        %v1843 = vadd.f32 %v1829, %v1834
        %v1844 = vmax.f32 %v1836, 0.0
        %v1845 = vmax.f32 %v1837, 0.0
        %v1846 = vmax.f32 %v1838, 0.0
        %v1847 = vmax.f32 %v1839, 0.0
        %v1848 = vmax.f32 %v1840, 0.0
        %v1849 = vmax.f32 %v1841, 0.0
        %v1850 = vmax.f32 %v1842, 0.0
        %v1851 = vmax.f32 %v1843, 0.0
        %v1852 = vpack.c.bf16 %v1845, %v1844
        %v1853 = vpack.c.bf16 %v1847, %v1846
        %v1854 = vpack.c.bf16 %v1849, %v1848
        %v1855 = vpack.c.bf16 %v1851, %v1850
        %v1860 = vunpack.c.l.b16 %v1852
        %v1861 = vunpack.c.h.b16 %v1852
        %v1862 = vunpack.c.l.b16 %v1853
        %v1863 = vunpack.c.h.b16 %v1853
        %v1864 = vunpack.c.l.b16 %v1854
        %v1865 = vunpack.c.h.b16 %v1854
        %v1866 = vunpack.c.l.b16 %v1855
        %v1867 = vunpack.c.h.b16 %v1855
        %v1868 = vpack.c.b16 %v1860, %v1860
        %v1869 = vpack.c.b16 %v1861, %v1861
        %v1870 = vpack.c.b16 %v1862, %v1862
        %v1871 = vpack.c.b16 %v1863, %v1863
        %v1872 = vpack.c.b16 %v1864, %v1864
        %v1873 = vpack.c.b16 %v1865, %v1865
        %v1874 = vpack.c.b16 %v1866, %v1866
        %v1875 = vpack.c.b16 %v1867, %v1867
        %1884 = vst [vmem:[%s232] sm:$0xf] %v1868
        %1885 = vst [vmem:[%s232 + $0x4] sm:$0xf] %v1869
        %1886 = vst [vmem:[%s232 + $0x8] sm:$0xf] %v1870
        %1887 = vst [vmem:[%s232 + $0xc] sm:$0xf] %v1871
        %1888 = vst [vmem:[%s232 + $0x10] sm:$0xf] %v1872
        %1889 = vst [vmem:[%s232 + $0x14] sm:$0xf] %v1873
        %1890 = vst [vmem:[%s232 + $0x18] sm:$0xf] %v1874
        %1891 = vst [vmem:[%s232 + $0x1c] sm:$0xf] %v1875
        %s1892 = sand.u32 %s138, 1
        %s1893 = scalar_lea.sflag [#allocation5], %s1892
        %s1894 = sand.u32 %s138, 1
        %s1895 = smul.addr %s1894, 32
        %s1896 = scalar_lea.vmem [#allocation6], %s1895
        // Predicated region
        $region45: #{tpu_custom_call.1} parent=39 // pred_check
          %p1897 = pneg %p148
        $region46: #{tpu_custom_call.1} parent=39 // pred_check_branch
          %1899 = sbr.rel (%p1897) target = $region48
        $region47: #{tpu_custom_call.1} parent=39 // pred_region
          %s1901 = ssub.s32 512, 512
          %1902 = vsyncadd %s1893, %s1901
          %s1903 = smul.addr %s20, 8
          %s1904 = smul.addr %s1903, 64
          %s1905 = scalar_lea.hbm %s5, %s1904
          %s1906 = sshll.u32 %s1896, 4
          %s1907 = int_to_ptr.vmem [resolvable:$true] %s1906
          %1912 = dma.vmem_to_hbm [thread:$0]  %s1907, 512, %s1905, %s1893, 64, 64, 4
        $region48: #{tpu_custom_call.1} parent=39 // pred_fallthru
          _
      $region40: #{tpu_custom_call.1} parent=5 // pred_fallthru
        _
      %p1913 = scmp.le.s32.totalorder 2, %s15
      // Predicated region
      $region49: #{tpu_custom_call.1} parent=5 // pred_check
        %p1914 = pneg %p1913
      $region50: #{tpu_custom_call.1} parent=5 // pred_check_branch
        %1916 = sbr.rel (%p1914) target = $region52
      $region51: #{tpu_custom_call.1} parent=5 // pred_region
        %s1917 = ssub.s32 %s15, 2
        // Predicated region
        $region53: #{tpu_custom_call.1} parent=51 // pred_check
          %p1918 = pneg %p154
        $region54: #{tpu_custom_call.1} parent=51 // pred_check_branch
          %1920 = sbr.rel (%p1918) target = $region56
        $region55: #{tpu_custom_call.1} parent=51 // pred_region
          %s1921 = sand.u32 %s139, 1
          %s1922 = scalar_lea.sflag [#allocation5], %s1921
          %s1923 = sand.u32 %s139, 1
          %s1924 = smul.addr %s1923, 32
          %s1925 = scalar_lea.vmem [#allocation6], %s1924
          %1926 = dma.done %s1922, 512
        $region56: #{tpu_custom_call.1} parent=51 // pred_fallthru
          _
      $region52: #{tpu_custom_call.1} parent=5 // pred_fallthru
        _
    $region6: #{tpu_custom_call.1} parent=1 // loop_footer
      %s19 = sadd.s32 1, %s15
    $region7: #{tpu_custom_call.1} parent=1 // loop_footer_branch
      %14 = sbr.rel target = $region3
    $region8: #{tpu_custom_call.1} parent=1 // loop_exit
      _
    %1927 = vsyncpa [#allocation4], 1
    %s1928 = scalar_lea.sflag [#allocation4], 1
    %1929 = vsyncpa %s1928, 1
    %1930 = vsyncpa [#allocation5], 1
    %s1931 = scalar_lea.sflag [#allocation5], 1
    %1932 = vsyncpa %s1931, 1

</llo_original>
